<compile_context>
chip_gen: v6e
topology: v6e:2x2x1
jax: 0.10.0
libtpu: 0.0.40
codegen_flags: <defaults>
</compile_context>

<pallas_src>
import functools

import jax
import jax.numpy as jnp
from jax import lax
from jax.experimental import pallas as pl
from jax.experimental.pallas import tpu as pltpu


def _round_up(n, m):
    return ((n + m - 1) // m) * m


def automaton_rnn_kernel(x_ref, h0_ref,
                         w_ih0_ref, b0_ref,
                         w_hh_ref, w_ih1_ref, b1_ref,
                         w_out_ref, b_out_ref,
                         out_ref, *, seq_len):
    """Whole-sequence 2-layer ReLU RNN recurrence + output projection in VMEM.

    All operands are pre-transposed / lane-padded to 128 by the wrapper:
      x_ref     : (SP, IP)        input sequence (rows >= seq_len are zero)
      h0_ref    : (1, HP)         initial hidden state
      w_ih0_ref : (IP, HP)        W_ih_l0.T
      b0_ref    : (1, HP)         b_ih_l0 + b_hh_l0
      w_hh_ref  : (HP, 2*HP)      [W_hh_l0.T | W_hh_l1.T]   (fused recurrent weights)
      w_ih1_ref : (HP, HP)        W_ih_l1.T
      b1_ref    : (1, HP)         b_ih_l1 + b_hh_l1
      w_out_ref : (HP, OP)        W_out.T
      b_out_ref : (1, OP)         b_out
    """
    HP = h0_ref.shape[1]

    # --- Hoisted input projection: one sublane/lane-dense matmul for the whole seq.
    xw0 = (jnp.dot(x_ref[...], w_ih0_ref[...], preferred_element_type=jnp.float32)
           + b0_ref[...])                                            # (SP, HP)

    # --- Load loop-invariant weights/biases into values once (held in vregs).
    w_hh = w_hh_ref[...]                                             # (HP, 2*HP)
    w_ih1 = w_ih1_ref[...]                                           # (HP, HP)
    b1 = b1_ref[...]                                                 # (1, HP)

    def step(xw0_t, h):
        # Single fused recurrent dot: h @ [W_hh0.T | W_hh1.T]  ->  (1, 2*HP)
        hw = jnp.dot(h, w_hh, preferred_element_type=jnp.float32)
        a = jnp.maximum(xw0_t + hw[:, :HP], 0.0)                     # layer-0 ReLU
        h_new = jnp.dot(a, w_ih1, preferred_element_type=jnp.float32)
        return jnp.maximum(h_new + hw[:, HP:] + b1, 0.0)             # layer-1 ReLU

    h = h0_ref[...]                                                  # (1, HP)
    if seq_len <= 64:
        # Full static unroll: seq is compile-time known and short; gives the LLO
        # scheduler cross-iteration visibility over the serial MXU dependency chain.
        for t in range(seq_len):
            h = step(xw0[t:t + 1, :], h)
    else:
        # Long-sequence fallback (keeps compile size bounded).
        h = lax.fori_loop(
            0, seq_len,
            lambda t, hc: step(lax.dynamic_slice_in_dim(xw0, t, 1, axis=0), hc),
            h, unroll=4)

    out_ref[...] = (jnp.dot(h, w_out_ref[...], preferred_element_type=jnp.float32)
                    + b_out_ref[...])


def automaton_rnn_forward(x, h0, params):
    """x: (1, seq, I) float32 (module only consumes batch index 0).
    h0: (hidden_size,). Returns (1, output_size)."""
    (w_ih0, w_hh0, b_ih0, b_hh0,
     w_ih1, w_hh1, b_ih1, b_hh1,
     w_out, b_out) = params
    H = w_hh0.shape[0]
    I = w_ih0.shape[1]
    O = w_out.shape[0]
    seq = x.shape[1]

    f32 = jnp.float32
    HP = _round_up(max(H, 128), 128)     # lane-pad hidden dim
    IP = _round_up(max(I, 128), 128)     # lane-pad input dim
    OP = _round_up(max(O, 128), 128)     # lane-pad output dim (lane-dense store)
    SP = _round_up(max(seq, 8), 8)       # sublane-pad sequence dim

    def pad2(a, r, c):
        a = a.astype(f32)
        return jnp.pad(a, ((0, r - a.shape[0]), (0, c - a.shape[1])))

    x_seq = x[0].astype(f32)                                   # (seq, I); batch>0 dropped
    x_pad = pad2(x_seq, SP, IP)
    h0_pad = pad2(h0.reshape(1, H), 1, HP)
    w_ih0_p = pad2(w_ih0.T, IP, HP)
    b0_p = pad2((b_ih0 + b_hh0).reshape(1, H), 1, HP)
    w_hh_fused = jnp.concatenate([pad2(w_hh0.T, HP, HP),
                                  pad2(w_hh1.T, HP, HP)], axis=1)   # (HP, 2*HP)
    w_ih1_p = pad2(w_ih1.T, HP, HP)
    b1_p = pad2((b_ih1 + b_hh1).reshape(1, H), 1, HP)
    w_out_p = pad2(w_out.T, HP, OP)
    b_out_p = pad2(b_out.reshape(1, O), 1, OP)

    args = (x_pad, h0_pad, w_ih0_p, b0_p, w_hh_fused, w_ih1_p, b1_p, w_out_p, b_out_p)
    in_specs = [pl.BlockSpec(memory_space=pltpu.MemorySpace.VMEM) for _ in args]

    out_pad = pl.pallas_call(
        functools.partial(automaton_rnn_kernel, seq_len=seq),
        out_shape=jax.ShapeDtypeStruct((1, OP), f32),
        in_specs=in_specs,
        out_specs=pl.BlockSpec(memory_space=pltpu.MemorySpace.VMEM),
    )(*args)
    return out_pad[:, :O]


def _reference_forward(x, h0, params):
    (w_ih0, w_hh0, b_ih0, b_hh0,
     w_ih1, w_hh1, b_ih1, b_hh1,
     w_out, b_out) = params
    h = h0.reshape(1, -1).astype(jnp.float32)
    seq = x.shape[1]
    for t in range(seq):
        x_t = x[0, t, :].reshape(1, -1)
        a = jnp.maximum(x_t @ w_ih0.T + b_ih0 + h @ w_hh0.T + b_hh0, 0.0)
        h = jnp.maximum(a @ w_ih1.T + b_ih1 + h @ w_hh1.T + b_hh1, 0.0)
    return h @ w_out.T + b_out


if __name__ == "__main__":
    # Small shapes consistent with the module:
    #   len(state_encoding)=4 states, len(input_encoding)=8 symbols
    #   -> hidden_size = 4 * 8 = 32 ; RNN input_size = 32 ; output_size = 2 (True/False)
    num_states, num_symbols = 4, 8
    H = num_states * num_symbols          # 32
    I = H                                 # encoded symbol dimension
    O = 2
    seq = 8

    key = jax.random.PRNGKey(0)
    ks = jax.random.split(key, 12)
    scale = 1.0 / jnp.sqrt(jnp.float32(H))

    def u(k, shape):
        return jax.random.uniform(k, shape, jnp.float32, -scale, scale)

    params = (
        u(ks[0], (H, I)),   # W_ih_l0
        u(ks[1], (H, H)),   # W_hh_l0
        u(ks[2], (H,)),     # b_ih_l0
        u(ks[3], (H,)),     # b_hh_l0
        u(ks[4], (H, H)),   # W_ih_l1
        u(ks[5], (H, H)),   # W_hh_l1
        u(ks[6], (H,)),     # b_ih_l1
        u(ks[7], (H,)),     # b_hh_l1
        u(ks[8], (O, H)),   # W_out
        u(ks[9], (O,)),     # b_out
    )

    # Deterministic state encoding: state s -> block-one-hot over the product space.
    state_encoding = jnp.kron(jnp.eye(num_states, dtype=jnp.float32),
                              jnp.ones((1, num_symbols), jnp.float32))  # (4, 32)
    dfa_initial_state = 0
    h0 = state_encoding[dfa_initial_state]                              # (32,)

    # Input sequence (already input-encoded, as in forward: do_input_encoding=False).
    x = jax.random.normal(ks[10], (1, seq, I), jnp.float32)

    out = automaton_rnn_forward(x, h0, params)
    out = jax.block_until_ready(out)

    ref = _reference_forward(x, h0, params)
    assert out.shape == (1, O)
    assert jnp.allclose(out, ref, atol=1e-5, rtol=1e-5), (out, ref)

    print("KERNEL_OK")
</pallas_src>

<mosaic_0001>
module attributes {stable_mosaic.version = 11 : i64} {
  func.func @automaton_rnn_kernel(%arg0: memref<8x128xf32, #tpu.memory_space<vmem>>, %arg1: memref<1x128xf32, #tpu.memory_space<vmem>>, %arg2: memref<128x128xf32, #tpu.memory_space<vmem>>, %arg3: memref<1x128xf32, #tpu.memory_space<vmem>>, %arg4: memref<128x256xf32, #tpu.memory_space<vmem>>, %arg5: memref<128x128xf32, #tpu.memory_space<vmem>>, %arg6: memref<1x128xf32, #tpu.memory_space<vmem>>, %arg7: memref<128x128xf32, #tpu.memory_space<vmem>>, %arg8: memref<1x128xf32, #tpu.memory_space<vmem>>, %arg9: memref<1x128xf32, #tpu.memory_space<vmem>>) attributes {dimension_semantics = [], scalar_prefetch = 0 : i64, scratch_operands = 0 : i64, tpu.core_type = #tpu.core_type<tc>} {
    %c0 = arith.constant 0 : index
    %c0_0 = arith.constant 0 : index
    %0 = vector.load %arg0[%c0, %c0_0] : memref<8x128xf32, #tpu.memory_space<vmem>>, vector<8x128xf32>
    %c0_1 = arith.constant 0 : index
    %c0_2 = arith.constant 0 : index
    %1 = vector.load %arg2[%c0_1, %c0_2] : memref<128x128xf32, #tpu.memory_space<vmem>>, vector<128x128xf32>
    %cst = arith.constant dense<0.000000e+00> : vector<8x128xf32>
    %2 = tpu.matmul %0, %1, %cst {dimension_numbers = #tpu.dot_dimension_numbers<[1], [0], [0], [1], [0, 0, 1, 1], [], []>} : vector<8x128xf32>, vector<128x128xf32>, vector<8x128xf32> -> vector<8x128xf32>
    %c0_3 = arith.constant 0 : index
    %c0_4 = arith.constant 0 : index
    %3 = vector.load %arg3[%c0_3, %c0_4] : memref<1x128xf32, #tpu.memory_space<vmem>>, vector<1x128xf32>
    %4 = vector.broadcast %3 : vector<1x128xf32> to vector<8x128xf32>
    %5 = arith.addf %2, %4 : vector<8x128xf32>
    %c0_5 = arith.constant 0 : index
    %c0_6 = arith.constant 0 : index
    %6 = vector.load %arg4[%c0_5, %c0_6] : memref<128x256xf32, #tpu.memory_space<vmem>>, vector<128x256xf32>
    %c0_7 = arith.constant 0 : index
    %c0_8 = arith.constant 0 : index
    %7 = vector.load %arg5[%c0_7, %c0_8] : memref<128x128xf32, #tpu.memory_space<vmem>>, vector<128x128xf32>
    %c0_9 = arith.constant 0 : index
    %c0_10 = arith.constant 0 : index
    %8 = vector.load %arg6[%c0_9, %c0_10] : memref<1x128xf32, #tpu.memory_space<vmem>>, vector<1x128xf32>
    %c0_11 = arith.constant 0 : index
    %c0_12 = arith.constant 0 : index
    %9 = vector.load %arg1[%c0_11, %c0_12] : memref<1x128xf32, #tpu.memory_space<vmem>>, vector<1x128xf32>
    %10 = vector.extract_strided_slice %5 {offsets = [0, 0], sizes = [1, 128], strides = [1, 1]} : vector<8x128xf32> to vector<1x128xf32>
    %cst_13 = arith.constant dense<0.000000e+00> : vector<1x256xf32>
    %11 = tpu.matmul %9, %6, %cst_13 {dimension_numbers = #tpu.dot_dimension_numbers<[1], [0], [0], [1], [0, 0, 1, 1], [], []>} : vector<1x128xf32>, vector<128x256xf32>, vector<1x256xf32> -> vector<1x256xf32>
    %12 = vector.extract_strided_slice %11 {offsets = [0, 0], sizes = [1, 128], strides = [1, 1]} : vector<1x256xf32> to vector<1x128xf32>
    %13 = arith.addf %10, %12 : vector<1x128xf32>
    %cst_14 = arith.constant 0.000000e+00 : f32
    %14 = vector.broadcast %cst_14 : f32 to vector<1x128xf32>
    %15 = arith.maximumf %13, %14 : vector<1x128xf32>
    %cst_15 = arith.constant dense<0.000000e+00> : vector<1x128xf32>
    %16 = tpu.matmul %15, %7, %cst_15 {dimension_numbers = #tpu.dot_dimension_numbers<[1], [0], [0], [1], [0, 0, 1, 1], [], []>} : vector<1x128xf32>, vector<128x128xf32>, vector<1x128xf32> -> vector<1x128xf32>
    %17 = vector.extract_strided_slice %11 {offsets = [0, 128], sizes = [1, 128], strides = [1, 1]} : vector<1x256xf32> to vector<1x128xf32>
    %18 = arith.addf %16, %17 : vector<1x128xf32>
    %19 = arith.addf %18, %8 : vector<1x128xf32>
    %cst_16 = arith.constant 0.000000e+00 : f32
    %20 = vector.broadcast %cst_16 : f32 to vector<1x128xf32>
    %21 = arith.maximumf %19, %20 : vector<1x128xf32>
    %22 = vector.extract_strided_slice %5 {offsets = [1, 0], sizes = [1, 128], strides = [1, 1]} : vector<8x128xf32> to vector<1x128xf32>
    %cst_17 = arith.constant dense<0.000000e+00> : vector<1x256xf32>
    %23 = tpu.matmul %21, %6, %cst_17 {dimension_numbers = #tpu.dot_dimension_numbers<[1], [0], [0], [1], [0, 0, 1, 1], [], []>} : vector<1x128xf32>, vector<128x256xf32>, vector<1x256xf32> -> vector<1x256xf32>
    %24 = vector.extract_strided_slice %23 {offsets = [0, 0], sizes = [1, 128], strides = [1, 1]} : vector<1x256xf32> to vector<1x128xf32>
    %25 = arith.addf %22, %24 : vector<1x128xf32>
    %cst_18 = arith.constant 0.000000e+00 : f32
    %26 = vector.broadcast %cst_18 : f32 to vector<1x128xf32>
    %27 = arith.maximumf %25, %26 : vector<1x128xf32>
    %cst_19 = arith.constant dense<0.000000e+00> : vector<1x128xf32>
    %28 = tpu.matmul %27, %7, %cst_19 {dimension_numbers = #tpu.dot_dimension_numbers<[1], [0], [0], [1], [0, 0, 1, 1], [], []>} : vector<1x128xf32>, vector<128x128xf32>, vector<1x128xf32> -> vector<1x128xf32>
    %29 = vector.extract_strided_slice %23 {offsets = [0, 128], sizes = [1, 128], strides = [1, 1]} : vector<1x256xf32> to vector<1x128xf32>
    %30 = arith.addf %28, %29 : vector<1x128xf32>
    %31 = arith.addf %30, %8 : vector<1x128xf32>
    %cst_20 = arith.constant 0.000000e+00 : f32
    %32 = vector.broadcast %cst_20 : f32 to vector<1x128xf32>
    %33 = arith.maximumf %31, %32 : vector<1x128xf32>
    %34 = vector.extract_strided_slice %5 {offsets = [2, 0], sizes = [1, 128], strides = [1, 1]} : vector<8x128xf32> to vector<1x128xf32>
    %cst_21 = arith.constant dense<0.000000e+00> : vector<1x256xf32>
    %35 = tpu.matmul %33, %6, %cst_21 {dimension_numbers = #tpu.dot_dimension_numbers<[1], [0], [0], [1], [0, 0, 1, 1], [], []>} : vector<1x128xf32>, vector<128x256xf32>, vector<1x256xf32> -> vector<1x256xf32>
    %36 = vector.extract_strided_slice %35 {offsets = [0, 0], sizes = [1, 128], strides = [1, 1]} : vector<1x256xf32> to vector<1x128xf32>
    %37 = arith.addf %34, %36 : vector<1x128xf32>
    %cst_22 = arith.constant 0.000000e+00 : f32
    %38 = vector.broadcast %cst_22 : f32 to vector<1x128xf32>
    %39 = arith.maximumf %37, %38 : vector<1x128xf32>
    %cst_23 = arith.constant dense<0.000000e+00> : vector<1x128xf32>
    %40 = tpu.matmul %39, %7, %cst_23 {dimension_numbers = #tpu.dot_dimension_numbers<[1], [0], [0], [1], [0, 0, 1, 1], [], []>} : vector<1x128xf32>, vector<128x128xf32>, vector<1x128xf32> -> vector<1x128xf32>
    %41 = vector.extract_strided_slice %35 {offsets = [0, 128], sizes = [1, 128], strides = [1, 1]} : vector<1x256xf32> to vector<1x128xf32>
    %42 = arith.addf %40, %41 : vector<1x128xf32>
    %43 = arith.addf %42, %8 : vector<1x128xf32>
    %cst_24 = arith.constant 0.000000e+00 : f32
    %44 = vector.broadcast %cst_24 : f32 to vector<1x128xf32>
    %45 = arith.maximumf %43, %44 : vector<1x128xf32>
    %46 = vector.extract_strided_slice %5 {offsets = [3, 0], sizes = [1, 128], strides = [1, 1]} : vector<8x128xf32> to vector<1x128xf32>
    %cst_25 = arith.constant dense<0.000000e+00> : vector<1x256xf32>
    %47 = tpu.matmul %45, %6, %cst_25 {dimension_numbers = #tpu.dot_dimension_numbers<[1], [0], [0], [1], [0, 0, 1, 1], [], []>} : vector<1x128xf32>, vector<128x256xf32>, vector<1x256xf32> -> vector<1x256xf32>
    %48 = vector.extract_strided_slice %47 {offsets = [0, 0], sizes = [1, 128], strides = [1, 1]} : vector<1x256xf32> to vector<1x128xf32>
    %49 = arith.addf %46, %48 : vector<1x128xf32>
    %cst_26 = arith.constant 0.000000e+00 : f32
    %50 = vector.broadcast %cst_26 : f32 to vector<1x128xf32>
    %51 = arith.maximumf %49, %50 : vector<1x128xf32>
    %cst_27 = arith.constant dense<0.000000e+00> : vector<1x128xf32>
    %52 = tpu.matmul %51, %7, %cst_27 {dimension_numbers = #tpu.dot_dimension_numbers<[1], [0], [0], [1], [0, 0, 1, 1], [], []>} : vector<1x128xf32>, vector<128x128xf32>, vector<1x128xf32> -> vector<1x128xf32>
    %53 = vector.extract_strided_slice %47 {offsets = [0, 128], sizes = [1, 128], strides = [1, 1]} : vector<1x256xf32> to vector<1x128xf32>
    %54 = arith.addf %52, %53 : vector<1x128xf32>
    %55 = arith.addf %54, %8 : vector<1x128xf32>
    %cst_28 = arith.constant 0.000000e+00 : f32
    %56 = vector.broadcast %cst_28 : f32 to vector<1x128xf32>
    %57 = arith.maximumf %55, %56 : vector<1x128xf32>
    %58 = vector.extract_strided_slice %5 {offsets = [4, 0], sizes = [1, 128], strides = [1, 1]} : vector<8x128xf32> to vector<1x128xf32>
    %cst_29 = arith.constant dense<0.000000e+00> : vector<1x256xf32>
    %59 = tpu.matmul %57, %6, %cst_29 {dimension_numbers = #tpu.dot_dimension_numbers<[1], [0], [0], [1], [0, 0, 1, 1], [], []>} : vector<1x128xf32>, vector<128x256xf32>, vector<1x256xf32> -> vector<1x256xf32>
    %60 = vector.extract_strided_slice %59 {offsets = [0, 0], sizes = [1, 128], strides = [1, 1]} : vector<1x256xf32> to vector<1x128xf32>
    %61 = arith.addf %58, %60 : vector<1x128xf32>
    %cst_30 = arith.constant 0.000000e+00 : f32
    %62 = vector.broadcast %cst_30 : f32 to vector<1x128xf32>
    %63 = arith.maximumf %61, %62 : vector<1x128xf32>
    %cst_31 = arith.constant dense<0.000000e+00> : vector<1x128xf32>
    %64 = tpu.matmul %63, %7, %cst_31 {dimension_numbers = #tpu.dot_dimension_numbers<[1], [0], [0], [1], [0, 0, 1, 1], [], []>} : vector<1x128xf32>, vector<128x128xf32>, vector<1x128xf32> -> vector<1x128xf32>
    %65 = vector.extract_strided_slice %59 {offsets = [0, 128], sizes = [1, 128], strides = [1, 1]} : vector<1x256xf32> to vector<1x128xf32>
    %66 = arith.addf %64, %65 : vector<1x128xf32>
    %67 = arith.addf %66, %8 : vector<1x128xf32>
    %cst_32 = arith.constant 0.000000e+00 : f32
    %68 = vector.broadcast %cst_32 : f32 to vector<1x128xf32>
    %69 = arith.maximumf %67, %68 : vector<1x128xf32>
    %70 = vector.extract_strided_slice %5 {offsets = [5, 0], sizes = [1, 128], strides = [1, 1]} : vector<8x128xf32> to vector<1x128xf32>
    %cst_33 = arith.constant dense<0.000000e+00> : vector<1x256xf32>
    %71 = tpu.matmul %69, %6, %cst_33 {dimension_numbers = #tpu.dot_dimension_numbers<[1], [0], [0], [1], [0, 0, 1, 1], [], []>} : vector<1x128xf32>, vector<128x256xf32>, vector<1x256xf32> -> vector<1x256xf32>
    %72 = vector.extract_strided_slice %71 {offsets = [0, 0], sizes = [1, 128], strides = [1, 1]} : vector<1x256xf32> to vector<1x128xf32>
    %73 = arith.addf %70, %72 : vector<1x128xf32>
    %cst_34 = arith.constant 0.000000e+00 : f32
    %74 = vector.broadcast %cst_34 : f32 to vector<1x128xf32>
    %75 = arith.maximumf %73, %74 : vector<1x128xf32>
    %cst_35 = arith.constant dense<0.000000e+00> : vector<1x128xf32>
    %76 = tpu.matmul %75, %7, %cst_35 {dimension_numbers = #tpu.dot_dimension_numbers<[1], [0], [0], [1], [0, 0, 1, 1], [], []>} : vector<1x128xf32>, vector<128x128xf32>, vector<1x128xf32> -> vector<1x128xf32>
    %77 = vector.extract_strided_slice %71 {offsets = [0, 128], sizes = [1, 128], strides = [1, 1]} : vector<1x256xf32> to vector<1x128xf32>
    %78 = arith.addf %76, %77 : vector<1x128xf32>
    %79 = arith.addf %78, %8 : vector<1x128xf32>
    %cst_36 = arith.constant 0.000000e+00 : f32
    %80 = vector.broadcast %cst_36 : f32 to vector<1x128xf32>
    %81 = arith.maximumf %79, %80 : vector<1x128xf32>
    %82 = vector.extract_strided_slice %5 {offsets = [6, 0], sizes = [1, 128], strides = [1, 1]} : vector<8x128xf32> to vector<1x128xf32>
    %cst_37 = arith.constant dense<0.000000e+00> : vector<1x256xf32>
    %83 = tpu.matmul %81, %6, %cst_37 {dimension_numbers = #tpu.dot_dimension_numbers<[1], [0], [0], [1], [0, 0, 1, 1], [], []>} : vector<1x128xf32>, vector<128x256xf32>, vector<1x256xf32> -> vector<1x256xf32>
    %84 = vector.extract_strided_slice %83 {offsets = [0, 0], sizes = [1, 128], strides = [1, 1]} : vector<1x256xf32> to vector<1x128xf32>
    %85 = arith.addf %82, %84 : vector<1x128xf32>
    %cst_38 = arith.constant 0.000000e+00 : f32
    %86 = vector.broadcast %cst_38 : f32 to vector<1x128xf32>
    %87 = arith.maximumf %85, %86 : vector<1x128xf32>
    %cst_39 = arith.constant dense<0.000000e+00> : vector<1x128xf32>
    %88 = tpu.matmul %87, %7, %cst_39 {dimension_numbers = #tpu.dot_dimension_numbers<[1], [0], [0], [1], [0, 0, 1, 1], [], []>} : vector<1x128xf32>, vector<128x128xf32>, vector<1x128xf32> -> vector<1x128xf32>
    %89 = vector.extract_strided_slice %83 {offsets = [0, 128], sizes = [1, 128], strides = [1, 1]} : vector<1x256xf32> to vector<1x128xf32>
    %90 = arith.addf %88, %89 : vector<1x128xf32>
    %91 = arith.addf %90, %8 : vector<1x128xf32>
    %cst_40 = arith.constant 0.000000e+00 : f32
    %92 = vector.broadcast %cst_40 : f32 to vector<1x128xf32>
    %93 = arith.maximumf %91, %92 : vector<1x128xf32>
    %94 = vector.extract_strided_slice %5 {offsets = [7, 0], sizes = [1, 128], strides = [1, 1]} : vector<8x128xf32> to vector<1x128xf32>
    %cst_41 = arith.constant dense<0.000000e+00> : vector<1x256xf32>
    %95 = tpu.matmul %93, %6, %cst_41 {dimension_numbers = #tpu.dot_dimension_numbers<[1], [0], [0], [1], [0, 0, 1, 1], [], []>} : vector<1x128xf32>, vector<128x256xf32>, vector<1x256xf32> -> vector<1x256xf32>
    %96 = vector.extract_strided_slice %95 {offsets = [0, 0], sizes = [1, 128], strides = [1, 1]} : vector<1x256xf32> to vector<1x128xf32>
    %97 = arith.addf %94, %96 : vector<1x128xf32>
    %cst_42 = arith.constant 0.000000e+00 : f32
    %98 = vector.broadcast %cst_42 : f32 to vector<1x128xf32>
    %99 = arith.maximumf %97, %98 : vector<1x128xf32>
    %cst_43 = arith.constant dense<0.000000e+00> : vector<1x128xf32>
    %100 = tpu.matmul %99, %7, %cst_43 {dimension_numbers = #tpu.dot_dimension_numbers<[1], [0], [0], [1], [0, 0, 1, 1], [], []>} : vector<1x128xf32>, vector<128x128xf32>, vector<1x128xf32> -> vector<1x128xf32>
    %101 = vector.extract_strided_slice %95 {offsets = [0, 128], sizes = [1, 128], strides = [1, 1]} : vector<1x256xf32> to vector<1x128xf32>
    %102 = arith.addf %100, %101 : vector<1x128xf32>
    %103 = arith.addf %102, %8 : vector<1x128xf32>
    %cst_44 = arith.constant 0.000000e+00 : f32
    %104 = vector.broadcast %cst_44 : f32 to vector<1x128xf32>
    %105 = arith.maximumf %103, %104 : vector<1x128xf32>
    %c0_45 = arith.constant 0 : index
    %c0_46 = arith.constant 0 : index
    %106 = vector.load %arg7[%c0_45, %c0_46] : memref<128x128xf32, #tpu.memory_space<vmem>>, vector<128x128xf32>
    %cst_47 = arith.constant dense<0.000000e+00> : vector<1x128xf32>
    %107 = tpu.matmul %105, %106, %cst_47 {dimension_numbers = #tpu.dot_dimension_numbers<[1], [0], [0], [1], [0, 0, 1, 1], [], []>} : vector<1x128xf32>, vector<128x128xf32>, vector<1x128xf32> -> vector<1x128xf32>
    %c0_48 = arith.constant 0 : index
    %c0_49 = arith.constant 0 : index
    %108 = vector.load %arg8[%c0_48, %c0_49] : memref<1x128xf32, #tpu.memory_space<vmem>>, vector<1x128xf32>
    %109 = arith.addf %107, %108 : vector<1x128xf32>
    %c0_50 = arith.constant 0 : index
    %c0_51 = arith.constant 0 : index
    %110 = vector.load %arg9[%c0_50, %c0_51] : memref<1x128xf32, #tpu.memory_space<vmem>>, vector<1x128xf32>
    tpu.vector_store %arg9[%c0_50, %c0_51], %109 {strides = array<i32>} : memref<1x128xf32, #tpu.memory_space<vmem>>, vector<1x128xf32>,
    return
  }
}

</mosaic_0001>

<llo_original>
// kernel: tpu_custom_call.1
$region0: #{tpu_custom_call.1}
  #allocation0 [shape = 'u32[]', space=smem, size = 0x4, offset = 0x4, fixed_abs, tag = 'smem constant byte address 0x4 - core index']
  #allocation1 [shape = 'u32[144,128]{1,0:T(1,128)}', space=vmem, size = 0x12000, scoped, tag = 'internal scratch']
  %s0 = inlined_call_operand.hbm [shape: f32[8,128], index: 0, kind: input, shape index: {}]
  %s1 = inlined_call_operand.vmem [shape: f32[1,128], index: 1, kind: input, shape index: {}]
  %s2 = inlined_call_operand.hbm [shape: f32[128,128], index: 2, kind: input, shape index: {}]
  %s3 = inlined_call_operand.vmem [shape: f32[1,128], index: 3, kind: input, shape index: {}]
  %s4 = inlined_call_operand.hbm [shape: f32[128,256], index: 4, kind: input, shape index: {}]
  %s5 = inlined_call_operand.hbm [shape: f32[128,128], index: 5, kind: input, shape index: {}]
  %s6 = inlined_call_operand.vmem [shape: f32[1,128], index: 6, kind: input, shape index: {}]
  %s7 = inlined_call_operand.hbm [shape: f32[128,128], index: 7, kind: input, shape index: {}]
  %s8 = inlined_call_operand.vmem [shape: f32[1,128], index: 8, kind: input, shape index: {}]
  %s9 = inlined_call_operand.hbm [shape: f32[1,128], index: 9, kind: output, shape index: {}]
  %s10 = sld [smem:[#allocation0]]
  $region66: #{tpu_custom_call.1} parent=0
    _
  %s12 = ssub.s32 1, %s10
  %s13 = scalar_select 0, %s12, %s10
  $region1: #{tpu_custom_call.1} parent=0
    #allocation2 [shape = 'u8[4096]{0}', space=vmem, size = 0x1000, scoped, tag = 'input window, operand 0, single buffered']
    #allocation3 [shape = 's32[1]{0}', space=sflag, size = 0x4, scoped, tag = 'scoped memory for tpu_custom_call.1']
    #allocation4 [shape = 's32[1]{0}', space=sflag, size = 0x4, scoped, tag = 'scoped memory for tpu_custom_call.1']
    #allocation5 [shape = 'u8[65536]{0}', space=vmem, size = 0x10000, scoped, tag = 'input window, operand 2, single buffered']
    #allocation6 [shape = 's32[1]{0}', space=sflag, size = 0x4, scoped, tag = 'scoped memory for tpu_custom_call.1']
    #allocation7 [shape = 'u8[131072]{0}', space=vmem, size = 0x20000, scoped, tag = 'input window, operand 4, single buffered']
    #allocation8 [shape = 'u8[65536]{0}', space=vmem, size = 0x10000, scoped, tag = 'input window, operand 5, single buffered']
    #allocation9 [shape = 's32[1]{0}', space=sflag, size = 0x4, scoped, tag = 'scoped memory for tpu_custom_call.1']
    #allocation10 [shape = 'u8[65536]{0}', space=vmem, size = 0x10000, scoped, tag = 'input window, operand 7, single buffered']
    #allocation11 [shape = 'u8[512]{0}', space=vmem, size = 0x400, scoped, tag = 'output window, operand 0, single buffered']
    %14 = vsyncpa [#allocation3], 0
    %15 = vsyncpa [#allocation6], 0
    %16 = vsyncpa [#allocation9], 0
    %17 = vsyncpa [#allocation4], 0
    // Predicated region
    $region2: #{tpu_custom_call.1} parent=1 // pred_check
      _
    $region3: #{tpu_custom_call.1} parent=1 // pred_check_branch
      %19 = sbr.rel (0) target = $region5
    $region4: #{tpu_custom_call.1} parent=1 // pred_region
      %s21 = ssub.s32 128, 128
      %22 = vsyncadd [#allocation3], %s21
      %s24 = sshll.u32 [#allocation2], 4
      %s25 = int_to_ptr.vmem [resolvable:$true] %s24
      %27 = dma.hbm_to_vmem [thread:$0]  %s0, 128, %s25, [#allocation3]
    $region5: #{tpu_custom_call.1} parent=1 // pred_fallthru
      _
    // Predicated region
    $region6: #{tpu_custom_call.1} parent=1 // pred_check
      _
    $region7: #{tpu_custom_call.1} parent=1 // pred_check_branch
      %29 = sbr.rel (0) target = $region9
    $region8: #{tpu_custom_call.1} parent=1 // pred_region
      _
    $region9: #{tpu_custom_call.1} parent=1 // pred_fallthru
      _
    // Predicated region
    $region10: #{tpu_custom_call.1} parent=1 // pred_check
      _
    $region11: #{tpu_custom_call.1} parent=1 // pred_check_branch
      %31 = sbr.rel (0) target = $region13
    $region12: #{tpu_custom_call.1} parent=1 // pred_region
      %s33 = ssub.s32 2048, 2048
      %34 = vsyncadd [#allocation6], %s33
      %s35 = sshll.u32 [#allocation5], 4
      %s36 = int_to_ptr.vmem [resolvable:$true] %s35
      %41 = dma.hbm_to_vmem [thread:$0]  %s2, 2048, %s36, [#allocation6], 128, 128, 8
    $region13: #{tpu_custom_call.1} parent=1 // pred_fallthru
      _
    // Predicated region
    $region14: #{tpu_custom_call.1} parent=1 // pred_check
      _
    $region15: #{tpu_custom_call.1} parent=1 // pred_check_branch
      %43 = sbr.rel (0) target = $region17
    $region16: #{tpu_custom_call.1} parent=1 // pred_region
      _
    $region17: #{tpu_custom_call.1} parent=1 // pred_fallthru
      _
    // Predicated region
    $region18: #{tpu_custom_call.1} parent=1 // pred_check
      _
    $region19: #{tpu_custom_call.1} parent=1 // pred_check_branch
      %45 = sbr.rel (0) target = $region21
    $region20: #{tpu_custom_call.1} parent=1 // pred_region
      %s47 = ssub.s32 4096, 4096
      %48 = vsyncadd [#allocation6], %s47
      %s49 = sshll.u32 [#allocation7], 4
      %s50 = int_to_ptr.vmem [resolvable:$true] %s49
      %55 = dma.hbm_to_vmem [thread:$0]  %s4, 4096, %s50, [#allocation6], 256, 256, 16
    $region21: #{tpu_custom_call.1} parent=1 // pred_fallthru
      _
    // Predicated region
    $region22: #{tpu_custom_call.1} parent=1 // pred_check
      _
    $region23: #{tpu_custom_call.1} parent=1 // pred_check_branch
      %57 = sbr.rel (0) target = $region25
    $region24: #{tpu_custom_call.1} parent=1 // pred_region
      %s59 = ssub.s32 2048, 2048
      %60 = vsyncadd [#allocation9], %s59
      %s61 = sshll.u32 [#allocation8], 4
      %s62 = int_to_ptr.vmem [resolvable:$true] %s61
      %67 = dma.hbm_to_vmem [thread:$0]  %s5, 2048, %s62, [#allocation9], 128, 128, 8
    $region25: #{tpu_custom_call.1} parent=1 // pred_fallthru
      _
    // Predicated region
    $region26: #{tpu_custom_call.1} parent=1 // pred_check
      _
    $region27: #{tpu_custom_call.1} parent=1 // pred_check_branch
      %69 = sbr.rel (0) target = $region29
    $region28: #{tpu_custom_call.1} parent=1 // pred_region
      _
    $region29: #{tpu_custom_call.1} parent=1 // pred_fallthru
      _
    // Predicated region
    $region30: #{tpu_custom_call.1} parent=1 // pred_check
      _
    $region31: #{tpu_custom_call.1} parent=1 // pred_check_branch
      %71 = sbr.rel (0) target = $region33
    $region32: #{tpu_custom_call.1} parent=1 // pred_region
      %s73 = ssub.s32 2048, 2048
      %74 = vsyncadd [#allocation9], %s73
      %s75 = sshll.u32 [#allocation10], 4
      %s76 = int_to_ptr.vmem [resolvable:$true] %s75
      %81 = dma.hbm_to_vmem [thread:$0]  %s7, 2048, %s76, [#allocation9], 128, 128, 8
    $region33: #{tpu_custom_call.1} parent=1 // pred_fallthru
      _
    // Predicated region
    $region34: #{tpu_custom_call.1} parent=1 // pred_check
      _
    $region35: #{tpu_custom_call.1} parent=1 // pred_check_branch
      %83 = sbr.rel (0) target = $region37
    $region36: #{tpu_custom_call.1} parent=1 // pred_region
      _
    $region37: #{tpu_custom_call.1} parent=1 // pred_fallthru
      _
    // Predicated region
    $region38: #{tpu_custom_call.1} parent=1 // pred_check
      _
    $region39: #{tpu_custom_call.1} parent=1 // pred_check_branch
      %85 = sbr.rel (0) target = $region41
    $region40: #{tpu_custom_call.1} parent=1 // pred_region
      %86 = dma.done [#allocation3], 128
    $region41: #{tpu_custom_call.1} parent=1 // pred_fallthru
      _
    // Predicated region
    $region42: #{tpu_custom_call.1} parent=1 // pred_check
      _
    $region43: #{tpu_custom_call.1} parent=1 // pred_check_branch
      %88 = sbr.rel (0) target = $region45
    $region44: #{tpu_custom_call.1} parent=1 // pred_region
      %89 = dma.done [#allocation6], 2048
    $region45: #{tpu_custom_call.1} parent=1 // pred_fallthru
      _
    // Predicated region
    $region46: #{tpu_custom_call.1} parent=1 // pred_check
      _
    $region47: #{tpu_custom_call.1} parent=1 // pred_check_branch
      %91 = sbr.rel (0) target = $region49
    $region48: #{tpu_custom_call.1} parent=1 // pred_region
      %92 = dma.done [#allocation6], 4096
    $region49: #{tpu_custom_call.1} parent=1 // pred_fallthru
      _
    // Predicated region
    $region50: #{tpu_custom_call.1} parent=1 // pred_check
      _
    $region51: #{tpu_custom_call.1} parent=1 // pred_check_branch
      %94 = sbr.rel (0) target = $region53
    $region52: #{tpu_custom_call.1} parent=1 // pred_region
      %95 = dma.done [#allocation9], 2048
    $region53: #{tpu_custom_call.1} parent=1 // pred_fallthru
      _
    // Predicated region
    $region54: #{tpu_custom_call.1} parent=1 // pred_check
      _
    $region55: #{tpu_custom_call.1} parent=1 // pred_check_branch
      %97 = sbr.rel (0) target = $region57
    $region56: #{tpu_custom_call.1} parent=1 // pred_region
      %98 = dma.done [#allocation9], 2048
    $region57: #{tpu_custom_call.1} parent=1 // pred_fallthru
      _
    %v99 = vld [vmem:[#allocation2] sm:$0xff]
    %v100 = vld [vmem:[#allocation5] sm:$0xff]
    %v101 = vld [vmem:[#allocation5 + $0x8] sm:$0xff]
    %v102 = vld [vmem:[#allocation5 + $0x10] sm:$0xff]
    %v103 = vld [vmem:[#allocation5 + $0x18] sm:$0xff]
    %v104 = vld [vmem:[#allocation5 + $0x20] sm:$0xff]
    %v105 = vld [vmem:[#allocation5 + $0x28] sm:$0xff]
    %v106 = vld [vmem:[#allocation5 + $0x30] sm:$0xff]
    %v107 = vld [vmem:[#allocation5 + $0x38] sm:$0xff]
    %v108 = vld [vmem:[#allocation5 + $0x40] sm:$0xff]
    %v109 = vld [vmem:[#allocation5 + $0x48] sm:$0xff]
    %v110 = vld [vmem:[#allocation5 + $0x50] sm:$0xff]
    %v111 = vld [vmem:[#allocation5 + $0x58] sm:$0xff]
    %v112 = vld [vmem:[#allocation5 + $0x60] sm:$0xff]
    %v113 = vld [vmem:[#allocation5 + $0x68] sm:$0xff]
    %v114 = vld [vmem:[#allocation5 + $0x70] sm:$0xff]
    %v115 = vld [vmem:[#allocation5 + $0x78] sm:$0xff]
    %v116 = vld [vmem:[%s3] sm:$0x1]
    %v118 = vlaneseq
    %v119 = vshrl.u32 %v118, 7
    %v120 = vsub.s32 0, %v119
    %v121 = vrot.slane %v116, %v120
    %123 = vmatprep.subr.mxu0 0.0
    %124 = vmatpush1.msra.mxu0 %v115
    %125 = vmatprep.subr.mxu0 0.0
    %126 = vmatpush1.msra.mxu0 %v114
    %127 = vmatprep.subr.mxu0 0.0
    %128 = vmatpush1.msra.mxu0 %v113
    %129 = vmatprep.subr.mxu0 0.0
    %130 = vmatpush1.msra.mxu0 %v112
    %131 = vmatprep.subr.mxu0 0.0
    %132 = vmatpush1.msra.mxu0 %v111
    %133 = vmatprep.subr.mxu0 0.0
    %134 = vmatpush1.msra.mxu0 %v110
    %135 = vmatprep.subr.mxu0 0.0
    %136 = vmatpush1.msra.mxu0 %v109
    %137 = vmatprep.subr.mxu0 0.0
    %138 = vmatpush1.msra.mxu0 %v108
    %139 = vmatprep.subr.mxu0 0.0
    %140 = vmatpush1.msra.mxu0 %v107
    %141 = vmatprep.subr.mxu0 0.0
    %142 = vmatpush1.msra.mxu0 %v106
    %143 = vmatprep.subr.mxu0 0.0
    %144 = vmatpush1.msra.mxu0 %v105
    %145 = vmatprep.subr.mxu0 0.0
    %146 = vmatpush1.msra.mxu0 %v104
    %147 = vmatprep.subr.mxu0 0.0
    %148 = vmatpush1.msra.mxu0 %v103
    %149 = vmatprep.subr.mxu0 0.0
    %150 = vmatpush1.msra.mxu0 %v102
    %151 = vmatprep.subr.mxu0 0.0
    %152 = vmatpush1.msra.mxu0 %v101
    %153 = vmatprep.subr.mxu0 0.0
    %154 = vmatpush1.msra.mxu0 %v100
    %155 = vmatprep.subr.mxu0 0.0
    %156 = vmatpush2.msra.mxu0 0.0
    %157 = vmatprep.subr.mxu0 0.0
    %158 = vmatpush2.msra.mxu0 0.0
    %159 = vmatprep.subr.mxu0 0.0
    %160 = vmatpush2.msra.mxu0 0.0
    %161 = vmatprep.subr.mxu0 0.0
    %162 = vmatpush2.msra.mxu0 0.0
    %163 = vmatprep.subr.mxu0 0.0
    %164 = vmatpush2.msra.mxu0 0.0
    %165 = vmatprep.subr.mxu0 0.0
    %166 = vmatpush2.msra.mxu0 0.0
    %167 = vmatprep.subr.mxu0 0.0
    %168 = vmatpush2.msra.mxu0 0.0
    %169 = vmatprep.subr.mxu0 0.0
    %170 = vmatpush2.msra.mxu0 0.0
    %171 = vmatprep.subr.mxu0 0.0
    %172 = vmatpush2.msra.mxu0 0.0
    %173 = vmatprep.subr.mxu0 0.0
    %174 = vmatpush2.msra.mxu0 0.0
    %175 = vmatprep.subr.mxu0 0.0
    %176 = vmatpush2.msra.mxu0 0.0
    %177 = vmatprep.subr.mxu0 0.0
    %178 = vmatpush2.msra.mxu0 0.0
    %179 = vmatprep.subr.mxu0 0.0
    %180 = vmatpush2.msra.mxu0 0.0
    %181 = vmatprep.subr.mxu0 0.0
    %182 = vmatpush2.msra.mxu0 0.0
    %183 = vmatprep.subr.mxu0 0.0
    %184 = vmatpush2.msra.mxu0 0.0
    %185 = vmatprep.subr.mxu0 0.0
    %186 = vmatpush2.msra.mxu0 0.0
    %187 = vmatprep.mubr.f32.mxu0 0.0
    %188 = vmatmul.mubr.f32.gmra.mxu0 %v99
    %v189 = vpop.f32.mrf.mxu0
    %v190 = vadd.f32 %v121, %v189
    %v191 = vpop.f32.mrf.mxu0
    %192 = vdwg.mxu0
    %v193 = vld [vmem:[#allocation7] sm:$0xff]
    %v194 = vld [vmem:[#allocation7 + $0x8] sm:$0xff]
    %v195 = vld [vmem:[#allocation7 + $0x10] sm:$0xff]
    %v196 = vld [vmem:[#allocation7 + $0x18] sm:$0xff]
    %v197 = vld [vmem:[#allocation7 + $0x20] sm:$0xff]
    %v198 = vld [vmem:[#allocation7 + $0x28] sm:$0xff]
    %v199 = vld [vmem:[#allocation7 + $0x30] sm:$0xff]
    %v200 = vld [vmem:[#allocation7 + $0x38] sm:$0xff]
    %v201 = vld [vmem:[#allocation7 + $0x40] sm:$0xff]
    %v202 = vld [vmem:[#allocation7 + $0x48] sm:$0xff]
    %v203 = vld [vmem:[#allocation7 + $0x50] sm:$0xff]
    %v204 = vld [vmem:[#allocation7 + $0x58] sm:$0xff]
    %v205 = vld [vmem:[#allocation7 + $0x60] sm:$0xff]
    %v206 = vld [vmem:[#allocation7 + $0x68] sm:$0xff]
    %v207 = vld [vmem:[#allocation7 + $0x70] sm:$0xff]
    %v208 = vld [vmem:[#allocation7 + $0x78] sm:$0xff]
    %v209 = vld [vmem:[#allocation7 + $0x80] sm:$0xff]
    %v210 = vld [vmem:[#allocation7 + $0x88] sm:$0xff]
    %v211 = vld [vmem:[#allocation7 + $0x90] sm:$0xff]
    %v212 = vld [vmem:[#allocation7 + $0x98] sm:$0xff]
    %v213 = vld [vmem:[#allocation7 + $0xa0] sm:$0xff]
    %v214 = vld [vmem:[#allocation7 + $0xa8] sm:$0xff]
    %v215 = vld [vmem:[#allocation7 + $0xb0] sm:$0xff]
    %v216 = vld [vmem:[#allocation7 + $0xb8] sm:$0xff]
    %v217 = vld [vmem:[#allocation7 + $0xc0] sm:$0xff]
    %v218 = vld [vmem:[#allocation7 + $0xc8] sm:$0xff]
    %v219 = vld [vmem:[#allocation7 + $0xd0] sm:$0xff]
    %v220 = vld [vmem:[#allocation7 + $0xd8] sm:$0xff]
    %v221 = vld [vmem:[#allocation7 + $0xe0] sm:$0xff]
    %v222 = vld [vmem:[#allocation7 + $0xe8] sm:$0xff]
    %v223 = vld [vmem:[#allocation7 + $0xf0] sm:$0xff]
    %v224 = vld [vmem:[#allocation7 + $0xf8] sm:$0xff]
    %v225 = vld [vmem:[#allocation8] sm:$0xff]
    %v226 = vld [vmem:[#allocation8 + $0x8] sm:$0xff]
    %v227 = vld [vmem:[#allocation8 + $0x10] sm:$0xff]
    %v228 = vld [vmem:[#allocation8 + $0x18] sm:$0xff]
    %v229 = vld [vmem:[#allocation8 + $0x20] sm:$0xff]
    %v230 = vld [vmem:[#allocation8 + $0x28] sm:$0xff]
    %v231 = vld [vmem:[#allocation8 + $0x30] sm:$0xff]
    %v232 = vld [vmem:[#allocation8 + $0x38] sm:$0xff]
    %v233 = vld [vmem:[#allocation8 + $0x40] sm:$0xff]
    %v234 = vld [vmem:[#allocation8 + $0x48] sm:$0xff]
    %v235 = vld [vmem:[#allocation8 + $0x50] sm:$0xff]
    %v236 = vld [vmem:[#allocation8 + $0x58] sm:$0xff]
    %v237 = vld [vmem:[#allocation8 + $0x60] sm:$0xff]
    %v238 = vld [vmem:[#allocation8 + $0x68] sm:$0xff]
    %v239 = vld [vmem:[#allocation8 + $0x70] sm:$0xff]
    %v240 = vld [vmem:[#allocation8 + $0x78] sm:$0xff]
    %v241 = vld [vmem:[%s6] sm:$0x1]
    %v242 = vld [vmem:[%s1] sm:$0x1]
    %243 = vmatprep.subr.mxu0 %v224
    %244 = vmatpush1.msra.mxu0 %v223
    %245 = vmatprep.subr.mxu0 %v222
    %246 = vmatpush1.msra.mxu0 %v221
    %247 = vmatprep.subr.mxu0 %v220
    %248 = vmatpush1.msra.mxu0 %v219
    %249 = vmatprep.subr.mxu0 %v218
    %250 = vmatpush1.msra.mxu0 %v217
    %251 = vmatprep.subr.mxu0 %v216
    %252 = vmatpush1.msra.mxu0 %v215
    %253 = vmatprep.subr.mxu0 %v214
    %254 = vmatpush1.msra.mxu0 %v213
    %255 = vmatprep.subr.mxu0 %v212
    %256 = vmatpush1.msra.mxu0 %v211
    %257 = vmatprep.subr.mxu0 %v210
    %258 = vmatpush1.msra.mxu0 %v209
    %259 = vmatprep.subr.mxu0 %v208
    %260 = vmatpush1.msra.mxu0 %v207
    %261 = vmatprep.subr.mxu0 %v206
    %262 = vmatpush1.msra.mxu0 %v205
    %263 = vmatprep.subr.mxu0 %v204
    %264 = vmatpush1.msra.mxu0 %v203
    %265 = vmatprep.subr.mxu0 %v202
    %266 = vmatpush1.msra.mxu0 %v201
    %267 = vmatprep.subr.mxu0 %v200
    %268 = vmatpush1.msra.mxu0 %v199
    %269 = vmatprep.subr.mxu0 %v198
    %270 = vmatpush1.msra.mxu0 %v197
    %271 = vmatprep.subr.mxu0 %v196
    %272 = vmatpush1.msra.mxu0 %v195
    %273 = vmatprep.subr.mxu0 %v194
    %274 = vmatpush1.msra.mxu0 %v193
    %275 = vmatprep.subr.mxu0 0.0
    %276 = vmatpush2.msra.mxu0 0.0
    %277 = vmatprep.subr.mxu0 0.0
    %278 = vmatpush2.msra.mxu0 0.0
    %279 = vmatprep.subr.mxu0 0.0
    %280 = vmatpush2.msra.mxu0 0.0
    %281 = vmatprep.subr.mxu0 0.0
    %282 = vmatpush2.msra.mxu0 0.0
    %283 = vmatprep.subr.mxu0 0.0
    %284 = vmatpush2.msra.mxu0 0.0
    %285 = vmatprep.subr.mxu0 0.0
    %286 = vmatpush2.msra.mxu0 0.0
    %287 = vmatprep.subr.mxu0 0.0
    %288 = vmatpush2.msra.mxu0 0.0
    %289 = vmatprep.subr.mxu0 0.0
    %290 = vmatpush2.msra.mxu0 0.0
    %291 = vmatprep.subr.mxu0 0.0
    %292 = vmatpush2.msra.mxu0 0.0
    %293 = vmatprep.subr.mxu0 0.0
    %294 = vmatpush2.msra.mxu0 0.0
    %295 = vmatprep.subr.mxu0 0.0
    %296 = vmatpush2.msra.mxu0 0.0
    %297 = vmatprep.subr.mxu0 0.0
    %298 = vmatpush2.msra.mxu0 0.0
    %299 = vmatprep.subr.mxu0 0.0
    %300 = vmatpush2.msra.mxu0 0.0
    %301 = vmatprep.subr.mxu0 0.0
    %302 = vmatpush2.msra.mxu0 0.0
    %303 = vmatprep.subr.mxu0 0.0
    %304 = vmatpush2.msra.mxu0 0.0
    %305 = vmatprep.subr.mxu0 0.0
    %306 = vmatpush2.msra.mxu0 0.0
    %307 = vmatprep.mubr.f32.mxu0 0.0
    %308 = vmatmul.mubr.f32.gmra.mxu0 %v242
    %v309 = vpop.f32.mrf.mxu0
    %v310 = vadd.f32 0.0, %v309
    %v311 = vpop.f32.mrf.mxu0
    %v312 = vadd.f32 0.0, %v311
    %313 = vdwg.mxu0
    %v314 = vadd.f32 %v190, %v310
    %v315 = vmax.f32 %v314, 0.0
    %316 = vmatprep.subr.mxu0 0.0
    %317 = vmatpush1.msra.mxu0 %v240
    %318 = vmatprep.subr.mxu0 0.0
    %319 = vmatpush1.msra.mxu0 %v239
    %320 = vmatprep.subr.mxu0 0.0
    %321 = vmatpush1.msra.mxu0 %v238
    %322 = vmatprep.subr.mxu0 0.0
    %323 = vmatpush1.msra.mxu0 %v237
    %324 = vmatprep.subr.mxu0 0.0
    %325 = vmatpush1.msra.mxu0 %v236
    %326 = vmatprep.subr.mxu0 0.0
    %327 = vmatpush1.msra.mxu0 %v235
    %328 = vmatprep.subr.mxu0 0.0
    %329 = vmatpush1.msra.mxu0 %v234
    %330 = vmatprep.subr.mxu0 0.0
    %331 = vmatpush1.msra.mxu0 %v233
    %332 = vmatprep.subr.mxu0 0.0
    %333 = vmatpush1.msra.mxu0 %v232
    %334 = vmatprep.subr.mxu0 0.0
    %335 = vmatpush1.msra.mxu0 %v231
    %336 = vmatprep.subr.mxu0 0.0
    %337 = vmatpush1.msra.mxu0 %v230
    %338 = vmatprep.subr.mxu0 0.0
    %339 = vmatpush1.msra.mxu0 %v229
    %340 = vmatprep.subr.mxu0 0.0
    %341 = vmatpush1.msra.mxu0 %v228
    %342 = vmatprep.subr.mxu0 0.0
    %343 = vmatpush1.msra.mxu0 %v227
    %344 = vmatprep.subr.mxu0 0.0
    %345 = vmatpush1.msra.mxu0 %v226
    %346 = vmatprep.subr.mxu0 0.0
    %347 = vmatpush1.msra.mxu0 %v225
    %348 = vmatprep.subr.mxu0 0.0
    %349 = vmatpush2.msra.mxu0 0.0
    %350 = vmatprep.subr.mxu0 0.0
    %351 = vmatpush2.msra.mxu0 0.0
    %352 = vmatprep.subr.mxu0 0.0
    %353 = vmatpush2.msra.mxu0 0.0
    %354 = vmatprep.subr.mxu0 0.0
    %355 = vmatpush2.msra.mxu0 0.0
    %356 = vmatprep.subr.mxu0 0.0
    %357 = vmatpush2.msra.mxu0 0.0
    %358 = vmatprep.subr.mxu0 0.0
    %359 = vmatpush2.msra.mxu0 0.0
    %360 = vmatprep.subr.mxu0 0.0
    %361 = vmatpush2.msra.mxu0 0.0
    %362 = vmatprep.subr.mxu0 0.0
    %363 = vmatpush2.msra.mxu0 0.0
    %364 = vmatprep.subr.mxu0 0.0
    %365 = vmatpush2.msra.mxu0 0.0
    %366 = vmatprep.subr.mxu0 0.0
    %367 = vmatpush2.msra.mxu0 0.0
    %368 = vmatprep.subr.mxu0 0.0
    %369 = vmatpush2.msra.mxu0 0.0
    %370 = vmatprep.subr.mxu0 0.0
    %371 = vmatpush2.msra.mxu0 0.0
    %372 = vmatprep.subr.mxu0 0.0
    %373 = vmatpush2.msra.mxu0 0.0
    %374 = vmatprep.subr.mxu0 0.0
    %375 = vmatpush2.msra.mxu0 0.0
    %376 = vmatprep.subr.mxu0 0.0
    %377 = vmatpush2.msra.mxu0 0.0
    %378 = vmatprep.subr.mxu0 0.0
    %379 = vmatpush2.msra.mxu0 0.0
    %380 = vmatprep.mubr.f32.mxu0 0.0
    %381 = vmatmul.mubr.f32.gmra.mxu0 %v315
    %v382 = vpop.f32.mrf.mxu0
    %v383 = vadd.f32 %v312, %v382
    %v384 = vpop.f32.mrf.mxu0
    %385 = vdwg.mxu0
    %v386 = vadd.f32 %v383, %v241
    %v387 = vmax.f32 %v386, 0.0
    %388 = vmatprep.subr.mxu0 %v224
    %389 = vmatpush1.msra.mxu0 %v223
    %390 = vmatprep.subr.mxu0 %v222
    %391 = vmatpush1.msra.mxu0 %v221
    %392 = vmatprep.subr.mxu0 %v220
    %393 = vmatpush1.msra.mxu0 %v219
    %394 = vmatprep.subr.mxu0 %v218
    %395 = vmatpush1.msra.mxu0 %v217
    %396 = vmatprep.subr.mxu0 %v216
    %397 = vmatpush1.msra.mxu0 %v215
    %398 = vmatprep.subr.mxu0 %v214
    %399 = vmatpush1.msra.mxu0 %v213
    %400 = vmatprep.subr.mxu0 %v212
    %401 = vmatpush1.msra.mxu0 %v211
    %402 = vmatprep.subr.mxu0 %v210
    %403 = vmatpush1.msra.mxu0 %v209
    %404 = vmatprep.subr.mxu0 %v208
    %405 = vmatpush1.msra.mxu0 %v207
    %406 = vmatprep.subr.mxu0 %v206
    %407 = vmatpush1.msra.mxu0 %v205
    %408 = vmatprep.subr.mxu0 %v204
    %409 = vmatpush1.msra.mxu0 %v203
    %410 = vmatprep.subr.mxu0 %v202
    %411 = vmatpush1.msra.mxu0 %v201
    %412 = vmatprep.subr.mxu0 %v200
    %413 = vmatpush1.msra.mxu0 %v199
    %414 = vmatprep.subr.mxu0 %v198
    %415 = vmatpush1.msra.mxu0 %v197
    %416 = vmatprep.subr.mxu0 %v196
    %417 = vmatpush1.msra.mxu0 %v195
    %418 = vmatprep.subr.mxu0 %v194
    %419 = vmatpush1.msra.mxu0 %v193
    %420 = vmatprep.subr.mxu0 0.0
    %421 = vmatpush2.msra.mxu0 0.0
    %422 = vmatprep.subr.mxu0 0.0
    %423 = vmatpush2.msra.mxu0 0.0
    %424 = vmatprep.subr.mxu0 0.0
    %425 = vmatpush2.msra.mxu0 0.0
    %426 = vmatprep.subr.mxu0 0.0
    %427 = vmatpush2.msra.mxu0 0.0
    %428 = vmatprep.subr.mxu0 0.0
    %429 = vmatpush2.msra.mxu0 0.0
    %430 = vmatprep.subr.mxu0 0.0
    %431 = vmatpush2.msra.mxu0 0.0
    %432 = vmatprep.subr.mxu0 0.0
    %433 = vmatpush2.msra.mxu0 0.0
    %434 = vmatprep.subr.mxu0 0.0
    %435 = vmatpush2.msra.mxu0 0.0
    %436 = vmatprep.subr.mxu0 0.0
    %437 = vmatpush2.msra.mxu0 0.0
    %438 = vmatprep.subr.mxu0 0.0
    %439 = vmatpush2.msra.mxu0 0.0
    %440 = vmatprep.subr.mxu0 0.0
    %441 = vmatpush2.msra.mxu0 0.0
    %442 = vmatprep.subr.mxu0 0.0
    %443 = vmatpush2.msra.mxu0 0.0
    %444 = vmatprep.subr.mxu0 0.0
    %445 = vmatpush2.msra.mxu0 0.0
    %446 = vmatprep.subr.mxu0 0.0
    %447 = vmatpush2.msra.mxu0 0.0
    %448 = vmatprep.subr.mxu0 0.0
    %449 = vmatpush2.msra.mxu0 0.0
    %450 = vmatprep.subr.mxu0 0.0
    %451 = vmatpush2.msra.mxu0 0.0
    %452 = vmatprep.mubr.f32.mxu0 0.0
    %453 = vmatmul.mubr.f32.gmra.mxu0 %v387
    %v454 = vpop.f32.mrf.mxu0
    %v455 = vadd.f32 0.0, %v454
    %v456 = vpop.f32.mrf.mxu0
    %v457 = vadd.f32 0.0, %v456
    %458 = vdwg.mxu0
    %v460 = vrot.slane %v455, 7
    %v462 = vadd.f32 %v190, %v460
    %v463 = vmax.f32 %v462, 0.0
    %v465 = vrot.slane %v463, 1
    %467 = vmatprep.subr.mxu0 0.0
    %468 = vmatpush1.msra.mxu0 %v240
    %469 = vmatprep.subr.mxu0 0.0
    %470 = vmatpush1.msra.mxu0 %v239
    %471 = vmatprep.subr.mxu0 0.0
    %472 = vmatpush1.msra.mxu0 %v238
    %473 = vmatprep.subr.mxu0 0.0
    %474 = vmatpush1.msra.mxu0 %v237
    %475 = vmatprep.subr.mxu0 0.0
    %476 = vmatpush1.msra.mxu0 %v236
    %477 = vmatprep.subr.mxu0 0.0
    %478 = vmatpush1.msra.mxu0 %v235
    %479 = vmatprep.subr.mxu0 0.0
    %480 = vmatpush1.msra.mxu0 %v234
    %481 = vmatprep.subr.mxu0 0.0
    %482 = vmatpush1.msra.mxu0 %v233
    %483 = vmatprep.subr.mxu0 0.0
    %484 = vmatpush1.msra.mxu0 %v232
    %485 = vmatprep.subr.mxu0 0.0
    %486 = vmatpush1.msra.mxu0 %v231
    %487 = vmatprep.subr.mxu0 0.0
    %488 = vmatpush1.msra.mxu0 %v230
    %489 = vmatprep.subr.mxu0 0.0
    %490 = vmatpush1.msra.mxu0 %v229
    %491 = vmatprep.subr.mxu0 0.0
    %492 = vmatpush1.msra.mxu0 %v228
    %493 = vmatprep.subr.mxu0 0.0
    %494 = vmatpush1.msra.mxu0 %v227
    %495 = vmatprep.subr.mxu0 0.0
    %496 = vmatpush1.msra.mxu0 %v226
    %497 = vmatprep.subr.mxu0 0.0
    %498 = vmatpush1.msra.mxu0 %v225
    %499 = vmatprep.subr.mxu0 0.0
    %500 = vmatpush2.msra.mxu0 0.0
    %501 = vmatprep.subr.mxu0 0.0
    %502 = vmatpush2.msra.mxu0 0.0
    %503 = vmatprep.subr.mxu0 0.0
    %504 = vmatpush2.msra.mxu0 0.0
    %505 = vmatprep.subr.mxu0 0.0
    %506 = vmatpush2.msra.mxu0 0.0
    %507 = vmatprep.subr.mxu0 0.0
    %508 = vmatpush2.msra.mxu0 0.0
    %509 = vmatprep.subr.mxu0 0.0
    %510 = vmatpush2.msra.mxu0 0.0
    %511 = vmatprep.subr.mxu0 0.0
    %512 = vmatpush2.msra.mxu0 0.0
    %513 = vmatprep.subr.mxu0 0.0
    %514 = vmatpush2.msra.mxu0 0.0
    %515 = vmatprep.subr.mxu0 0.0
    %516 = vmatpush2.msra.mxu0 0.0
    %517 = vmatprep.subr.mxu0 0.0
    %518 = vmatpush2.msra.mxu0 0.0
    %519 = vmatprep.subr.mxu0 0.0
    %520 = vmatpush2.msra.mxu0 0.0
    %521 = vmatprep.subr.mxu0 0.0
    %522 = vmatpush2.msra.mxu0 0.0
    %523 = vmatprep.subr.mxu0 0.0
    %524 = vmatpush2.msra.mxu0 0.0
    %525 = vmatprep.subr.mxu0 0.0
    %526 = vmatpush2.msra.mxu0 0.0
    %527 = vmatprep.subr.mxu0 0.0
    %528 = vmatpush2.msra.mxu0 0.0
    %529 = vmatprep.subr.mxu0 0.0
    %530 = vmatpush2.msra.mxu0 0.0
    %531 = vmatprep.mubr.f32.mxu0 0.0
    %532 = vmatmul.mubr.f32.gmra.mxu0 %v465
    %v533 = vpop.f32.mrf.mxu0
    %v534 = vadd.f32 %v457, %v533
    %v535 = vpop.f32.mrf.mxu0
    %536 = vdwg.mxu0
    %v537 = vadd.f32 %v534, %v241
    %v538 = vmax.f32 %v537, 0.0
    %539 = vmatprep.subr.mxu0 %v224
    %540 = vmatpush1.msra.mxu0 %v223
    %541 = vmatprep.subr.mxu0 %v222
    %542 = vmatpush1.msra.mxu0 %v221
    %543 = vmatprep.subr.mxu0 %v220
    %544 = vmatpush1.msra.mxu0 %v219
    %545 = vmatprep.subr.mxu0 %v218
    %546 = vmatpush1.msra.mxu0 %v217
    %547 = vmatprep.subr.mxu0 %v216
    %548 = vmatpush1.msra.mxu0 %v215
    %549 = vmatprep.subr.mxu0 %v214
    %550 = vmatpush1.msra.mxu0 %v213
    %551 = vmatprep.subr.mxu0 %v212
    %552 = vmatpush1.msra.mxu0 %v211
    %553 = vmatprep.subr.mxu0 %v210
    %554 = vmatpush1.msra.mxu0 %v209
    %555 = vmatprep.subr.mxu0 %v208
    %556 = vmatpush1.msra.mxu0 %v207
    %557 = vmatprep.subr.mxu0 %v206
    %558 = vmatpush1.msra.mxu0 %v205
    %559 = vmatprep.subr.mxu0 %v204
    %560 = vmatpush1.msra.mxu0 %v203
    %561 = vmatprep.subr.mxu0 %v202
    %562 = vmatpush1.msra.mxu0 %v201
    %563 = vmatprep.subr.mxu0 %v200
    %564 = vmatpush1.msra.mxu0 %v199
    %565 = vmatprep.subr.mxu0 %v198
    %566 = vmatpush1.msra.mxu0 %v197
    %567 = vmatprep.subr.mxu0 %v196
    %568 = vmatpush1.msra.mxu0 %v195
    %569 = vmatprep.subr.mxu0 %v194
    %570 = vmatpush1.msra.mxu0 %v193
    %571 = vmatprep.subr.mxu0 0.0
    %572 = vmatpush2.msra.mxu0 0.0
    %573 = vmatprep.subr.mxu0 0.0
    %574 = vmatpush2.msra.mxu0 0.0
    %575 = vmatprep.subr.mxu0 0.0
    %576 = vmatpush2.msra.mxu0 0.0
    %577 = vmatprep.subr.mxu0 0.0
    %578 = vmatpush2.msra.mxu0 0.0
    %579 = vmatprep.subr.mxu0 0.0
    %580 = vmatpush2.msra.mxu0 0.0
    %581 = vmatprep.subr.mxu0 0.0
    %582 = vmatpush2.msra.mxu0 0.0
    %583 = vmatprep.subr.mxu0 0.0
    %584 = vmatpush2.msra.mxu0 0.0
    %585 = vmatprep.subr.mxu0 0.0
    %586 = vmatpush2.msra.mxu0 0.0
    %587 = vmatprep.subr.mxu0 0.0
    %588 = vmatpush2.msra.mxu0 0.0
    %589 = vmatprep.subr.mxu0 0.0
    %590 = vmatpush2.msra.mxu0 0.0
    %591 = vmatprep.subr.mxu0 0.0
    %592 = vmatpush2.msra.mxu0 0.0
    %593 = vmatprep.subr.mxu0 0.0
    %594 = vmatpush2.msra.mxu0 0.0
    %595 = vmatprep.subr.mxu0 0.0
    %596 = vmatpush2.msra.mxu0 0.0
    %597 = vmatprep.subr.mxu0 0.0
    %598 = vmatpush2.msra.mxu0 0.0
    %599 = vmatprep.subr.mxu0 0.0
    %600 = vmatpush2.msra.mxu0 0.0
    %601 = vmatprep.subr.mxu0 0.0
    %602 = vmatpush2.msra.mxu0 0.0
    %603 = vmatprep.mubr.f32.mxu0 0.0
    %604 = vmatmul.mubr.f32.gmra.mxu0 %v538
    %v605 = vpop.f32.mrf.mxu0
    %v606 = vadd.f32 0.0, %v605
    %v607 = vpop.f32.mrf.mxu0
    %v608 = vadd.f32 0.0, %v607
    %609 = vdwg.mxu0
    %v611 = vrot.slane %v606, 6
    %v613 = vadd.f32 %v190, %v611
    %v614 = vmax.f32 %v613, 0.0
    %v616 = vrot.slane %v614, 2
    %618 = vmatprep.subr.mxu0 0.0
    %619 = vmatpush1.msra.mxu0 %v240
    %620 = vmatprep.subr.mxu0 0.0
    %621 = vmatpush1.msra.mxu0 %v239
    %622 = vmatprep.subr.mxu0 0.0
    %623 = vmatpush1.msra.mxu0 %v238
    %624 = vmatprep.subr.mxu0 0.0
    %625 = vmatpush1.msra.mxu0 %v237
    %626 = vmatprep.subr.mxu0 0.0
    %627 = vmatpush1.msra.mxu0 %v236
    %628 = vmatprep.subr.mxu0 0.0
    %629 = vmatpush1.msra.mxu0 %v235
    %630 = vmatprep.subr.mxu0 0.0
    %631 = vmatpush1.msra.mxu0 %v234
    %632 = vmatprep.subr.mxu0 0.0
    %633 = vmatpush1.msra.mxu0 %v233
    %634 = vmatprep.subr.mxu0 0.0
    %635 = vmatpush1.msra.mxu0 %v232
    %636 = vmatprep.subr.mxu0 0.0
    %637 = vmatpush1.msra.mxu0 %v231
    %638 = vmatprep.subr.mxu0 0.0
    %639 = vmatpush1.msra.mxu0 %v230
    %640 = vmatprep.subr.mxu0 0.0
    %641 = vmatpush1.msra.mxu0 %v229
    %642 = vmatprep.subr.mxu0 0.0
    %643 = vmatpush1.msra.mxu0 %v228
    %644 = vmatprep.subr.mxu0 0.0
    %645 = vmatpush1.msra.mxu0 %v227
    %646 = vmatprep.subr.mxu0 0.0
    %647 = vmatpush1.msra.mxu0 %v226
    %648 = vmatprep.subr.mxu0 0.0
    %649 = vmatpush1.msra.mxu0 %v225
    %650 = vmatprep.subr.mxu0 0.0
    %651 = vmatpush2.msra.mxu0 0.0
    %652 = vmatprep.subr.mxu0 0.0
    %653 = vmatpush2.msra.mxu0 0.0
    %654 = vmatprep.subr.mxu0 0.0
    %655 = vmatpush2.msra.mxu0 0.0
    %656 = vmatprep.subr.mxu0 0.0
    %657 = vmatpush2.msra.mxu0 0.0
    %658 = vmatprep.subr.mxu0 0.0
    %659 = vmatpush2.msra.mxu0 0.0
    %660 = vmatprep.subr.mxu0 0.0
    %661 = vmatpush2.msra.mxu0 0.0
    %662 = vmatprep.subr.mxu0 0.0
    %663 = vmatpush2.msra.mxu0 0.0
    %664 = vmatprep.subr.mxu0 0.0
    %665 = vmatpush2.msra.mxu0 0.0
    %666 = vmatprep.subr.mxu0 0.0
    %667 = vmatpush2.msra.mxu0 0.0
    %668 = vmatprep.subr.mxu0 0.0
    %669 = vmatpush2.msra.mxu0 0.0
    %670 = vmatprep.subr.mxu0 0.0
    %671 = vmatpush2.msra.mxu0 0.0
    %672 = vmatprep.subr.mxu0 0.0
    %673 = vmatpush2.msra.mxu0 0.0
    %674 = vmatprep.subr.mxu0 0.0
    %675 = vmatpush2.msra.mxu0 0.0
    %676 = vmatprep.subr.mxu0 0.0
    %677 = vmatpush2.msra.mxu0 0.0
    %678 = vmatprep.subr.mxu0 0.0
    %679 = vmatpush2.msra.mxu0 0.0
    %680 = vmatprep.subr.mxu0 0.0
    %681 = vmatpush2.msra.mxu0 0.0
    %682 = vmatprep.mubr.f32.mxu0 0.0
    %683 = vmatmul.mubr.f32.gmra.mxu0 %v616
    %v684 = vpop.f32.mrf.mxu0
    %v685 = vadd.f32 %v608, %v684
    %v686 = vpop.f32.mrf.mxu0
    %687 = vdwg.mxu0
    %v688 = vadd.f32 %v685, %v241
    %v689 = vmax.f32 %v688, 0.0
    %690 = vmatprep.subr.mxu0 %v224
    %691 = vmatpush1.msra.mxu0 %v223
    %692 = vmatprep.subr.mxu0 %v222
    %693 = vmatpush1.msra.mxu0 %v221
    %694 = vmatprep.subr.mxu0 %v220
    %695 = vmatpush1.msra.mxu0 %v219
    %696 = vmatprep.subr.mxu0 %v218
    %697 = vmatpush1.msra.mxu0 %v217
    %698 = vmatprep.subr.mxu0 %v216
    %699 = vmatpush1.msra.mxu0 %v215
    %700 = vmatprep.subr.mxu0 %v214
    %701 = vmatpush1.msra.mxu0 %v213
    %702 = vmatprep.subr.mxu0 %v212
    %703 = vmatpush1.msra.mxu0 %v211
    %704 = vmatprep.subr.mxu0 %v210
    %705 = vmatpush1.msra.mxu0 %v209
    %706 = vmatprep.subr.mxu0 %v208
    %707 = vmatpush1.msra.mxu0 %v207
    %708 = vmatprep.subr.mxu0 %v206
    %709 = vmatpush1.msra.mxu0 %v205
    %710 = vmatprep.subr.mxu0 %v204
    %711 = vmatpush1.msra.mxu0 %v203
    %712 = vmatprep.subr.mxu0 %v202
    %713 = vmatpush1.msra.mxu0 %v201
    %714 = vmatprep.subr.mxu0 %v200
    %715 = vmatpush1.msra.mxu0 %v199
    %716 = vmatprep.subr.mxu0 %v198
    %717 = vmatpush1.msra.mxu0 %v197
    %718 = vmatprep.subr.mxu0 %v196
    %719 = vmatpush1.msra.mxu0 %v195
    %720 = vmatprep.subr.mxu0 %v194
    %721 = vmatpush1.msra.mxu0 %v193
    %722 = vmatprep.subr.mxu0 0.0
    %723 = vmatpush2.msra.mxu0 0.0
    %724 = vmatprep.subr.mxu0 0.0
    %725 = vmatpush2.msra.mxu0 0.0
    %726 = vmatprep.subr.mxu0 0.0
    %727 = vmatpush2.msra.mxu0 0.0
    %728 = vmatprep.subr.mxu0 0.0
    %729 = vmatpush2.msra.mxu0 0.0
    %730 = vmatprep.subr.mxu0 0.0
    %731 = vmatpush2.msra.mxu0 0.0
    %732 = vmatprep.subr.mxu0 0.0
    %733 = vmatpush2.msra.mxu0 0.0
    %734 = vmatprep.subr.mxu0 0.0
    %735 = vmatpush2.msra.mxu0 0.0
    %736 = vmatprep.subr.mxu0 0.0
    %737 = vmatpush2.msra.mxu0 0.0
    %738 = vmatprep.subr.mxu0 0.0
    %739 = vmatpush2.msra.mxu0 0.0
    %740 = vmatprep.subr.mxu0 0.0
    %741 = vmatpush2.msra.mxu0 0.0
    %742 = vmatprep.subr.mxu0 0.0
    %743 = vmatpush2.msra.mxu0 0.0
    %744 = vmatprep.subr.mxu0 0.0
    %745 = vmatpush2.msra.mxu0 0.0
    %746 = vmatprep.subr.mxu0 0.0
    %747 = vmatpush2.msra.mxu0 0.0
    %748 = vmatprep.subr.mxu0 0.0
    %749 = vmatpush2.msra.mxu0 0.0
    %750 = vmatprep.subr.mxu0 0.0
    %751 = vmatpush2.msra.mxu0 0.0
    %752 = vmatprep.subr.mxu0 0.0
    %753 = vmatpush2.msra.mxu0 0.0
    %754 = vmatprep.mubr.f32.mxu0 0.0
    %755 = vmatmul.mubr.f32.gmra.mxu0 %v689
    %v756 = vpop.f32.mrf.mxu0
    %v757 = vadd.f32 0.0, %v756
    %v758 = vpop.f32.mrf.mxu0
    %v759 = vadd.f32 0.0, %v758
    %760 = vdwg.mxu0
    %v762 = vrot.slane %v757, 5
    %v764 = vadd.f32 %v190, %v762
    %v765 = vmax.f32 %v764, 0.0
    %v767 = vrot.slane %v765, 3
    %769 = vmatprep.subr.mxu0 0.0
    %770 = vmatpush1.msra.mxu0 %v240
    %771 = vmatprep.subr.mxu0 0.0
    %772 = vmatpush1.msra.mxu0 %v239
    %773 = vmatprep.subr.mxu0 0.0
    %774 = vmatpush1.msra.mxu0 %v238
    %775 = vmatprep.subr.mxu0 0.0
    %776 = vmatpush1.msra.mxu0 %v237
    %777 = vmatprep.subr.mxu0 0.0
    %778 = vmatpush1.msra.mxu0 %v236
    %779 = vmatprep.subr.mxu0 0.0
    %780 = vmatpush1.msra.mxu0 %v235
    %781 = vmatprep.subr.mxu0 0.0
    %782 = vmatpush1.msra.mxu0 %v234
    %783 = vmatprep.subr.mxu0 0.0
    %784 = vmatpush1.msra.mxu0 %v233
    %785 = vmatprep.subr.mxu0 0.0
    %786 = vmatpush1.msra.mxu0 %v232
    %787 = vmatprep.subr.mxu0 0.0
    %788 = vmatpush1.msra.mxu0 %v231
    %789 = vmatprep.subr.mxu0 0.0
    %790 = vmatpush1.msra.mxu0 %v230
    %791 = vmatprep.subr.mxu0 0.0
    %792 = vmatpush1.msra.mxu0 %v229
    %793 = vmatprep.subr.mxu0 0.0
    %794 = vmatpush1.msra.mxu0 %v228
    %795 = vmatprep.subr.mxu0 0.0
    %796 = vmatpush1.msra.mxu0 %v227
    %797 = vmatprep.subr.mxu0 0.0
    %798 = vmatpush1.msra.mxu0 %v226
    %799 = vmatprep.subr.mxu0 0.0
    %800 = vmatpush1.msra.mxu0 %v225
    %801 = vmatprep.subr.mxu0 0.0
    %802 = vmatpush2.msra.mxu0 0.0
    %803 = vmatprep.subr.mxu0 0.0
    %804 = vmatpush2.msra.mxu0 0.0
    %805 = vmatprep.subr.mxu0 0.0
    %806 = vmatpush2.msra.mxu0 0.0
    %807 = vmatprep.subr.mxu0 0.0
    %808 = vmatpush2.msra.mxu0 0.0
    %809 = vmatprep.subr.mxu0 0.0
    %810 = vmatpush2.msra.mxu0 0.0
    %811 = vmatprep.subr.mxu0 0.0
    %812 = vmatpush2.msra.mxu0 0.0
    %813 = vmatprep.subr.mxu0 0.0
    %814 = vmatpush2.msra.mxu0 0.0
    %815 = vmatprep.subr.mxu0 0.0
    %816 = vmatpush2.msra.mxu0 0.0
    %817 = vmatprep.subr.mxu0 0.0
    %818 = vmatpush2.msra.mxu0 0.0
    %819 = vmatprep.subr.mxu0 0.0
    %820 = vmatpush2.msra.mxu0 0.0
    %821 = vmatprep.subr.mxu0 0.0
    %822 = vmatpush2.msra.mxu0 0.0
    %823 = vmatprep.subr.mxu0 0.0
    %824 = vmatpush2.msra.mxu0 0.0
    %825 = vmatprep.subr.mxu0 0.0
    %826 = vmatpush2.msra.mxu0 0.0
    %827 = vmatprep.subr.mxu0 0.0
    %828 = vmatpush2.msra.mxu0 0.0
    %829 = vmatprep.subr.mxu0 0.0
    %830 = vmatpush2.msra.mxu0 0.0
    %831 = vmatprep.subr.mxu0 0.0
    %832 = vmatpush2.msra.mxu0 0.0
    %833 = vmatprep.mubr.f32.mxu0 0.0
    %834 = vmatmul.mubr.f32.gmra.mxu0 %v767
    %v835 = vpop.f32.mrf.mxu0
    %v836 = vadd.f32 %v759, %v835
    %v837 = vpop.f32.mrf.mxu0
    %838 = vdwg.mxu0
    %v839 = vadd.f32 %v836, %v241
    %v840 = vmax.f32 %v839, 0.0
    %841 = vmatprep.subr.mxu0 %v224
    %842 = vmatpush1.msra.mxu0 %v223
    %843 = vmatprep.subr.mxu0 %v222
    %844 = vmatpush1.msra.mxu0 %v221
    %845 = vmatprep.subr.mxu0 %v220
    %846 = vmatpush1.msra.mxu0 %v219
    %847 = vmatprep.subr.mxu0 %v218
    %848 = vmatpush1.msra.mxu0 %v217
    %849 = vmatprep.subr.mxu0 %v216
    %850 = vmatpush1.msra.mxu0 %v215
    %851 = vmatprep.subr.mxu0 %v214
    %852 = vmatpush1.msra.mxu0 %v213
    %853 = vmatprep.subr.mxu0 %v212
    %854 = vmatpush1.msra.mxu0 %v211
    %855 = vmatprep.subr.mxu0 %v210
    %856 = vmatpush1.msra.mxu0 %v209
    %857 = vmatprep.subr.mxu0 %v208
    %858 = vmatpush1.msra.mxu0 %v207
    %859 = vmatprep.subr.mxu0 %v206
    %860 = vmatpush1.msra.mxu0 %v205
    %861 = vmatprep.subr.mxu0 %v204
    %862 = vmatpush1.msra.mxu0 %v203
    %863 = vmatprep.subr.mxu0 %v202
    %864 = vmatpush1.msra.mxu0 %v201
    %865 = vmatprep.subr.mxu0 %v200
    %866 = vmatpush1.msra.mxu0 %v199
    %867 = vmatprep.subr.mxu0 %v198
    %868 = vmatpush1.msra.mxu0 %v197
    %869 = vmatprep.subr.mxu0 %v196
    %870 = vmatpush1.msra.mxu0 %v195
    %871 = vmatprep.subr.mxu0 %v194
    %872 = vmatpush1.msra.mxu0 %v193
    %873 = vmatprep.subr.mxu0 0.0
    %874 = vmatpush2.msra.mxu0 0.0
    %875 = vmatprep.subr.mxu0 0.0
    %876 = vmatpush2.msra.mxu0 0.0
    %877 = vmatprep.subr.mxu0 0.0
    %878 = vmatpush2.msra.mxu0 0.0
    %879 = vmatprep.subr.mxu0 0.0
    %880 = vmatpush2.msra.mxu0 0.0
    %881 = vmatprep.subr.mxu0 0.0
    %882 = vmatpush2.msra.mxu0 0.0
    %883 = vmatprep.subr.mxu0 0.0
    %884 = vmatpush2.msra.mxu0 0.0
    %885 = vmatprep.subr.mxu0 0.0
    %886 = vmatpush2.msra.mxu0 0.0
    %887 = vmatprep.subr.mxu0 0.0
    %888 = vmatpush2.msra.mxu0 0.0
    %889 = vmatprep.subr.mxu0 0.0
    %890 = vmatpush2.msra.mxu0 0.0
    %891 = vmatprep.subr.mxu0 0.0
    %892 = vmatpush2.msra.mxu0 0.0
    %893 = vmatprep.subr.mxu0 0.0
    %894 = vmatpush2.msra.mxu0 0.0
    %895 = vmatprep.subr.mxu0 0.0
    %896 = vmatpush2.msra.mxu0 0.0
    %897 = vmatprep.subr.mxu0 0.0
    %898 = vmatpush2.msra.mxu0 0.0
    %899 = vmatprep.subr.mxu0 0.0
    %900 = vmatpush2.msra.mxu0 0.0
    %901 = vmatprep.subr.mxu0 0.0
    %902 = vmatpush2.msra.mxu0 0.0
    %903 = vmatprep.subr.mxu0 0.0
    %904 = vmatpush2.msra.mxu0 0.0
    %905 = vmatprep.mubr.f32.mxu0 0.0
    %906 = vmatmul.mubr.f32.gmra.mxu0 %v840
    %v907 = vpop.f32.mrf.mxu0
    %v908 = vadd.f32 0.0, %v907
    %v909 = vpop.f32.mrf.mxu0
    %v910 = vadd.f32 0.0, %v909
    %911 = vdwg.mxu0
    %v913 = vrot.slane %v908, 4
    %v915 = vadd.f32 %v190, %v913
    %v916 = vmax.f32 %v915, 0.0
    %v918 = vrot.slane %v916, 4
    %920 = vmatprep.subr.mxu0 0.0
    %921 = vmatpush1.msra.mxu0 %v240
    %922 = vmatprep.subr.mxu0 0.0
    %923 = vmatpush1.msra.mxu0 %v239
    %924 = vmatprep.subr.mxu0 0.0
    %925 = vmatpush1.msra.mxu0 %v238
    %926 = vmatprep.subr.mxu0 0.0
    %927 = vmatpush1.msra.mxu0 %v237
    %928 = vmatprep.subr.mxu0 0.0
    %929 = vmatpush1.msra.mxu0 %v236
    %930 = vmatprep.subr.mxu0 0.0
    %931 = vmatpush1.msra.mxu0 %v235
    %932 = vmatprep.subr.mxu0 0.0
    %933 = vmatpush1.msra.mxu0 %v234
    %934 = vmatprep.subr.mxu0 0.0
    %935 = vmatpush1.msra.mxu0 %v233
    %936 = vmatprep.subr.mxu0 0.0
    %937 = vmatpush1.msra.mxu0 %v232
    %938 = vmatprep.subr.mxu0 0.0
    %939 = vmatpush1.msra.mxu0 %v231
    %940 = vmatprep.subr.mxu0 0.0
    %941 = vmatpush1.msra.mxu0 %v230
    %942 = vmatprep.subr.mxu0 0.0
    %943 = vmatpush1.msra.mxu0 %v229
    %944 = vmatprep.subr.mxu0 0.0
    %945 = vmatpush1.msra.mxu0 %v228
    %946 = vmatprep.subr.mxu0 0.0
    %947 = vmatpush1.msra.mxu0 %v227
    %948 = vmatprep.subr.mxu0 0.0
    %949 = vmatpush1.msra.mxu0 %v226
    %950 = vmatprep.subr.mxu0 0.0
    %951 = vmatpush1.msra.mxu0 %v225
    %952 = vmatprep.subr.mxu0 0.0
    %953 = vmatpush2.msra.mxu0 0.0
    %954 = vmatprep.subr.mxu0 0.0
    %955 = vmatpush2.msra.mxu0 0.0
    %956 = vmatprep.subr.mxu0 0.0
    %957 = vmatpush2.msra.mxu0 0.0
    %958 = vmatprep.subr.mxu0 0.0
    %959 = vmatpush2.msra.mxu0 0.0
    %960 = vmatprep.subr.mxu0 0.0
    %961 = vmatpush2.msra.mxu0 0.0
    %962 = vmatprep.subr.mxu0 0.0
    %963 = vmatpush2.msra.mxu0 0.0
    %964 = vmatprep.subr.mxu0 0.0
    %965 = vmatpush2.msra.mxu0 0.0
    %966 = vmatprep.subr.mxu0 0.0
    %967 = vmatpush2.msra.mxu0 0.0
    %968 = vmatprep.subr.mxu0 0.0
    %969 = vmatpush2.msra.mxu0 0.0
    %970 = vmatprep.subr.mxu0 0.0
    %971 = vmatpush2.msra.mxu0 0.0
    %972 = vmatprep.subr.mxu0 0.0
    %973 = vmatpush2.msra.mxu0 0.0
    %974 = vmatprep.subr.mxu0 0.0
    %975 = vmatpush2.msra.mxu0 0.0
    %976 = vmatprep.subr.mxu0 0.0
    %977 = vmatpush2.msra.mxu0 0.0
    %978 = vmatprep.subr.mxu0 0.0
    %979 = vmatpush2.msra.mxu0 0.0
    %980 = vmatprep.subr.mxu0 0.0
    %981 = vmatpush2.msra.mxu0 0.0
    %982 = vmatprep.subr.mxu0 0.0
    %983 = vmatpush2.msra.mxu0 0.0
    %984 = vmatprep.mubr.f32.mxu0 0.0
    %985 = vmatmul.mubr.f32.gmra.mxu0 %v918
    %v986 = vpop.f32.mrf.mxu0
    %v987 = vadd.f32 %v910, %v986
    %v988 = vpop.f32.mrf.mxu0
    %989 = vdwg.mxu0
    %v990 = vadd.f32 %v987, %v241
    %v991 = vmax.f32 %v990, 0.0
    %992 = vmatprep.subr.mxu0 %v224
    %993 = vmatpush1.msra.mxu0 %v223
    %994 = vmatprep.subr.mxu0 %v222
    %995 = vmatpush1.msra.mxu0 %v221
    %996 = vmatprep.subr.mxu0 %v220
    %997 = vmatpush1.msra.mxu0 %v219
    %998 = vmatprep.subr.mxu0 %v218
    %999 = vmatpush1.msra.mxu0 %v217
    %1000 = vmatprep.subr.mxu0 %v216
    %1001 = vmatpush1.msra.mxu0 %v215
    %1002 = vmatprep.subr.mxu0 %v214
    %1003 = vmatpush1.msra.mxu0 %v213
    %1004 = vmatprep.subr.mxu0 %v212
    %1005 = vmatpush1.msra.mxu0 %v211
    %1006 = vmatprep.subr.mxu0 %v210
    %1007 = vmatpush1.msra.mxu0 %v209
    %1008 = vmatprep.subr.mxu0 %v208
    %1009 = vmatpush1.msra.mxu0 %v207
    %1010 = vmatprep.subr.mxu0 %v206
    %1011 = vmatpush1.msra.mxu0 %v205
    %1012 = vmatprep.subr.mxu0 %v204
    %1013 = vmatpush1.msra.mxu0 %v203
    %1014 = vmatprep.subr.mxu0 %v202
    %1015 = vmatpush1.msra.mxu0 %v201
    %1016 = vmatprep.subr.mxu0 %v200
    %1017 = vmatpush1.msra.mxu0 %v199
    %1018 = vmatprep.subr.mxu0 %v198
    %1019 = vmatpush1.msra.mxu0 %v197
    %1020 = vmatprep.subr.mxu0 %v196
    %1021 = vmatpush1.msra.mxu0 %v195
    %1022 = vmatprep.subr.mxu0 %v194
    %1023 = vmatpush1.msra.mxu0 %v193
    %1024 = vmatprep.subr.mxu0 0.0
    %1025 = vmatpush2.msra.mxu0 0.0
    %1026 = vmatprep.subr.mxu0 0.0
    %1027 = vmatpush2.msra.mxu0 0.0
    %1028 = vmatprep.subr.mxu0 0.0
    %1029 = vmatpush2.msra.mxu0 0.0
    %1030 = vmatprep.subr.mxu0 0.0
    %1031 = vmatpush2.msra.mxu0 0.0
    %1032 = vmatprep.subr.mxu0 0.0
    %1033 = vmatpush2.msra.mxu0 0.0
    %1034 = vmatprep.subr.mxu0 0.0
    %1035 = vmatpush2.msra.mxu0 0.0
    %1036 = vmatprep.subr.mxu0 0.0
    %1037 = vmatpush2.msra.mxu0 0.0
    %1038 = vmatprep.subr.mxu0 0.0
    %1039 = vmatpush2.msra.mxu0 0.0
    %1040 = vmatprep.subr.mxu0 0.0
    %1041 = vmatpush2.msra.mxu0 0.0
    %1042 = vmatprep.subr.mxu0 0.0
    %1043 = vmatpush2.msra.mxu0 0.0
    %1044 = vmatprep.subr.mxu0 0.0
    %1045 = vmatpush2.msra.mxu0 0.0
    %1046 = vmatprep.subr.mxu0 0.0
    %1047 = vmatpush2.msra.mxu0 0.0
    %1048 = vmatprep.subr.mxu0 0.0
    %1049 = vmatpush2.msra.mxu0 0.0
    %1050 = vmatprep.subr.mxu0 0.0
    %1051 = vmatpush2.msra.mxu0 0.0
    %1052 = vmatprep.subr.mxu0 0.0
    %1053 = vmatpush2.msra.mxu0 0.0
    %1054 = vmatprep.subr.mxu0 0.0
    %1055 = vmatpush2.msra.mxu0 0.0
    %1056 = vmatprep.mubr.f32.mxu0 0.0
    %1057 = vmatmul.mubr.f32.gmra.mxu0 %v991
    %v1058 = vpop.f32.mrf.mxu0
    %v1059 = vadd.f32 0.0, %v1058
    %v1060 = vpop.f32.mrf.mxu0
    %v1061 = vadd.f32 0.0, %v1060
    %1062 = vdwg.mxu0
    %v1064 = vrot.slane %v1059, 3
    %v1066 = vadd.f32 %v190, %v1064
    %v1067 = vmax.f32 %v1066, 0.0
    %v1069 = vrot.slane %v1067, 5
    %1071 = vmatprep.subr.mxu0 0.0
    %1072 = vmatpush1.msra.mxu0 %v240
    %1073 = vmatprep.subr.mxu0 0.0
    %1074 = vmatpush1.msra.mxu0 %v239
    %1075 = vmatprep.subr.mxu0 0.0
    %1076 = vmatpush1.msra.mxu0 %v238
    %1077 = vmatprep.subr.mxu0 0.0
    %1078 = vmatpush1.msra.mxu0 %v237
    %1079 = vmatprep.subr.mxu0 0.0
    %1080 = vmatpush1.msra.mxu0 %v236
    %1081 = vmatprep.subr.mxu0 0.0
    %1082 = vmatpush1.msra.mxu0 %v235
    %1083 = vmatprep.subr.mxu0 0.0
    %1084 = vmatpush1.msra.mxu0 %v234
    %1085 = vmatprep.subr.mxu0 0.0
    %1086 = vmatpush1.msra.mxu0 %v233
    %1087 = vmatprep.subr.mxu0 0.0
    %1088 = vmatpush1.msra.mxu0 %v232
    %1089 = vmatprep.subr.mxu0 0.0
    %1090 = vmatpush1.msra.mxu0 %v231
    %1091 = vmatprep.subr.mxu0 0.0
    %1092 = vmatpush1.msra.mxu0 %v230
    %1093 = vmatprep.subr.mxu0 0.0
    %1094 = vmatpush1.msra.mxu0 %v229
    %1095 = vmatprep.subr.mxu0 0.0
    %1096 = vmatpush1.msra.mxu0 %v228
    %1097 = vmatprep.subr.mxu0 0.0
    %1098 = vmatpush1.msra.mxu0 %v227
    %1099 = vmatprep.subr.mxu0 0.0
    %1100 = vmatpush1.msra.mxu0 %v226
    %1101 = vmatprep.subr.mxu0 0.0
    %1102 = vmatpush1.msra.mxu0 %v225
    %1103 = vmatprep.subr.mxu0 0.0
    %1104 = vmatpush2.msra.mxu0 0.0
    %1105 = vmatprep.subr.mxu0 0.0
    %1106 = vmatpush2.msra.mxu0 0.0
    %1107 = vmatprep.subr.mxu0 0.0
    %1108 = vmatpush2.msra.mxu0 0.0
    %1109 = vmatprep.subr.mxu0 0.0
    %1110 = vmatpush2.msra.mxu0 0.0
    %1111 = vmatprep.subr.mxu0 0.0
    %1112 = vmatpush2.msra.mxu0 0.0
    %1113 = vmatprep.subr.mxu0 0.0
    %1114 = vmatpush2.msra.mxu0 0.0
    %1115 = vmatprep.subr.mxu0 0.0
    %1116 = vmatpush2.msra.mxu0 0.0
    %1117 = vmatprep.subr.mxu0 0.0
    %1118 = vmatpush2.msra.mxu0 0.0
    %1119 = vmatprep.subr.mxu0 0.0
    %1120 = vmatpush2.msra.mxu0 0.0
    %1121 = vmatprep.subr.mxu0 0.0
    %1122 = vmatpush2.msra.mxu0 0.0
    %1123 = vmatprep.subr.mxu0 0.0
    %1124 = vmatpush2.msra.mxu0 0.0
    %1125 = vmatprep.subr.mxu0 0.0
    %1126 = vmatpush2.msra.mxu0 0.0
    %1127 = vmatprep.subr.mxu0 0.0
    %1128 = vmatpush2.msra.mxu0 0.0
    %1129 = vmatprep.subr.mxu0 0.0
    %1130 = vmatpush2.msra.mxu0 0.0
    %1131 = vmatprep.subr.mxu0 0.0
    %1132 = vmatpush2.msra.mxu0 0.0
    %1133 = vmatprep.subr.mxu0 0.0
    %1134 = vmatpush2.msra.mxu0 0.0
    %1135 = vmatprep.mubr.f32.mxu0 0.0
    %1136 = vmatmul.mubr.f32.gmra.mxu0 %v1069
    %v1137 = vpop.f32.mrf.mxu0
    %v1138 = vadd.f32 %v1061, %v1137
    %v1139 = vpop.f32.mrf.mxu0
    %1140 = vdwg.mxu0
    %v1141 = vadd.f32 %v1138, %v241
    %v1142 = vmax.f32 %v1141, 0.0
    %1143 = vmatprep.subr.mxu0 %v224
    %1144 = vmatpush1.msra.mxu0 %v223
    %1145 = vmatprep.subr.mxu0 %v222
    %1146 = vmatpush1.msra.mxu0 %v221
    %1147 = vmatprep.subr.mxu0 %v220
    %1148 = vmatpush1.msra.mxu0 %v219
    %1149 = vmatprep.subr.mxu0 %v218
    %1150 = vmatpush1.msra.mxu0 %v217
    %1151 = vmatprep.subr.mxu0 %v216
    %1152 = vmatpush1.msra.mxu0 %v215
    %1153 = vmatprep.subr.mxu0 %v214
    %1154 = vmatpush1.msra.mxu0 %v213
    %1155 = vmatprep.subr.mxu0 %v212
    %1156 = vmatpush1.msra.mxu0 %v211
    %1157 = vmatprep.subr.mxu0 %v210
    %1158 = vmatpush1.msra.mxu0 %v209
    %1159 = vmatprep.subr.mxu0 %v208
    %1160 = vmatpush1.msra.mxu0 %v207
    %1161 = vmatprep.subr.mxu0 %v206
    %1162 = vmatpush1.msra.mxu0 %v205
    %1163 = vmatprep.subr.mxu0 %v204
    %1164 = vmatpush1.msra.mxu0 %v203
    %1165 = vmatprep.subr.mxu0 %v202
    %1166 = vmatpush1.msra.mxu0 %v201
    %1167 = vmatprep.subr.mxu0 %v200
    %1168 = vmatpush1.msra.mxu0 %v199
    %1169 = vmatprep.subr.mxu0 %v198
    %1170 = vmatpush1.msra.mxu0 %v197
    %1171 = vmatprep.subr.mxu0 %v196
    %1172 = vmatpush1.msra.mxu0 %v195
    %1173 = vmatprep.subr.mxu0 %v194
    %1174 = vmatpush1.msra.mxu0 %v193
    %1175 = vmatprep.subr.mxu0 0.0
    %1176 = vmatpush2.msra.mxu0 0.0
    %1177 = vmatprep.subr.mxu0 0.0
    %1178 = vmatpush2.msra.mxu0 0.0
    %1179 = vmatprep.subr.mxu0 0.0
    %1180 = vmatpush2.msra.mxu0 0.0
    %1181 = vmatprep.subr.mxu0 0.0
    %1182 = vmatpush2.msra.mxu0 0.0
    %1183 = vmatprep.subr.mxu0 0.0
    %1184 = vmatpush2.msra.mxu0 0.0
    %1185 = vmatprep.subr.mxu0 0.0
    %1186 = vmatpush2.msra.mxu0 0.0
    %1187 = vmatprep.subr.mxu0 0.0
    %1188 = vmatpush2.msra.mxu0 0.0
    %1189 = vmatprep.subr.mxu0 0.0
    %1190 = vmatpush2.msra.mxu0 0.0
    %1191 = vmatprep.subr.mxu0 0.0
    %1192 = vmatpush2.msra.mxu0 0.0
    %1193 = vmatprep.subr.mxu0 0.0
    %1194 = vmatpush2.msra.mxu0 0.0
    %1195 = vmatprep.subr.mxu0 0.0
    %1196 = vmatpush2.msra.mxu0 0.0
    %1197 = vmatprep.subr.mxu0 0.0
    %1198 = vmatpush2.msra.mxu0 0.0
    %1199 = vmatprep.subr.mxu0 0.0
    %1200 = vmatpush2.msra.mxu0 0.0
    %1201 = vmatprep.subr.mxu0 0.0
    %1202 = vmatpush2.msra.mxu0 0.0
    %1203 = vmatprep.subr.mxu0 0.0
    %1204 = vmatpush2.msra.mxu0 0.0
    %1205 = vmatprep.subr.mxu0 0.0
    %1206 = vmatpush2.msra.mxu0 0.0
    %1207 = vmatprep.mubr.f32.mxu0 0.0
    %1208 = vmatmul.mubr.f32.gmra.mxu0 %v1142
    %v1209 = vpop.f32.mrf.mxu0
    %v1210 = vadd.f32 0.0, %v1209
    %v1211 = vpop.f32.mrf.mxu0
    %v1212 = vadd.f32 0.0, %v1211
    %1213 = vdwg.mxu0
    %v1215 = vrot.slane %v1210, 2
    %v1217 = vadd.f32 %v190, %v1215
    %v1218 = vmax.f32 %v1217, 0.0
    %v1220 = vrot.slane %v1218, 6
    %1222 = vmatprep.subr.mxu0 0.0
    %1223 = vmatpush1.msra.mxu0 %v240
    %1224 = vmatprep.subr.mxu0 0.0
    %1225 = vmatpush1.msra.mxu0 %v239
    %1226 = vmatprep.subr.mxu0 0.0
    %1227 = vmatpush1.msra.mxu0 %v238
    %1228 = vmatprep.subr.mxu0 0.0
    %1229 = vmatpush1.msra.mxu0 %v237
    %1230 = vmatprep.subr.mxu0 0.0
    %1231 = vmatpush1.msra.mxu0 %v236
    %1232 = vmatprep.subr.mxu0 0.0
    %1233 = vmatpush1.msra.mxu0 %v235
    %1234 = vmatprep.subr.mxu0 0.0
    %1235 = vmatpush1.msra.mxu0 %v234
    %1236 = vmatprep.subr.mxu0 0.0
    %1237 = vmatpush1.msra.mxu0 %v233
    %1238 = vmatprep.subr.mxu0 0.0
    %1239 = vmatpush1.msra.mxu0 %v232
    %1240 = vmatprep.subr.mxu0 0.0
    %1241 = vmatpush1.msra.mxu0 %v231
    %1242 = vmatprep.subr.mxu0 0.0
    %1243 = vmatpush1.msra.mxu0 %v230
    %1244 = vmatprep.subr.mxu0 0.0
    %1245 = vmatpush1.msra.mxu0 %v229
    %1246 = vmatprep.subr.mxu0 0.0
    %1247 = vmatpush1.msra.mxu0 %v228
    %1248 = vmatprep.subr.mxu0 0.0
    %1249 = vmatpush1.msra.mxu0 %v227
    %1250 = vmatprep.subr.mxu0 0.0
    %1251 = vmatpush1.msra.mxu0 %v226
    %1252 = vmatprep.subr.mxu0 0.0
    %1253 = vmatpush1.msra.mxu0 %v225
    %1254 = vmatprep.subr.mxu0 0.0
    %1255 = vmatpush2.msra.mxu0 0.0
    %1256 = vmatprep.subr.mxu0 0.0
    %1257 = vmatpush2.msra.mxu0 0.0
    %1258 = vmatprep.subr.mxu0 0.0
    %1259 = vmatpush2.msra.mxu0 0.0
    %1260 = vmatprep.subr.mxu0 0.0
    %1261 = vmatpush2.msra.mxu0 0.0
    %1262 = vmatprep.subr.mxu0 0.0
    %1263 = vmatpush2.msra.mxu0 0.0
    %1264 = vmatprep.subr.mxu0 0.0
    %1265 = vmatpush2.msra.mxu0 0.0
    %1266 = vmatprep.subr.mxu0 0.0
    %1267 = vmatpush2.msra.mxu0 0.0
    %1268 = vmatprep.subr.mxu0 0.0
    %1269 = vmatpush2.msra.mxu0 0.0
    %1270 = vmatprep.subr.mxu0 0.0
    %1271 = vmatpush2.msra.mxu0 0.0
    %1272 = vmatprep.subr.mxu0 0.0
    %1273 = vmatpush2.msra.mxu0 0.0
    %1274 = vmatprep.subr.mxu0 0.0
    %1275 = vmatpush2.msra.mxu0 0.0
    %1276 = vmatprep.subr.mxu0 0.0
    %1277 = vmatpush2.msra.mxu0 0.0
    %1278 = vmatprep.subr.mxu0 0.0
    %1279 = vmatpush2.msra.mxu0 0.0
    %1280 = vmatprep.subr.mxu0 0.0
    %1281 = vmatpush2.msra.mxu0 0.0
    %1282 = vmatprep.subr.mxu0 0.0
    %1283 = vmatpush2.msra.mxu0 0.0
    %1284 = vmatprep.subr.mxu0 0.0
    %1285 = vmatpush2.msra.mxu0 0.0
    %1286 = vmatprep.mubr.f32.mxu0 0.0
    %1287 = vmatmul.mubr.f32.gmra.mxu0 %v1220
    %v1288 = vpop.f32.mrf.mxu0
    %v1289 = vadd.f32 %v1212, %v1288
    %v1290 = vpop.f32.mrf.mxu0
    %1291 = vdwg.mxu0
    %v1292 = vadd.f32 %v1289, %v241
    %v1293 = vmax.f32 %v1292, 0.0
    %1294 = vmatprep.subr.mxu0 %v224
    %1295 = vmatpush1.msra.mxu0 %v223
    %1296 = vmatprep.subr.mxu0 %v222
    %1297 = vmatpush1.msra.mxu0 %v221
    %1298 = vmatprep.subr.mxu0 %v220
    %1299 = vmatpush1.msra.mxu0 %v219
    %1300 = vmatprep.subr.mxu0 %v218
    %1301 = vmatpush1.msra.mxu0 %v217
    %1302 = vmatprep.subr.mxu0 %v216
    %1303 = vmatpush1.msra.mxu0 %v215
    %1304 = vmatprep.subr.mxu0 %v214
    %1305 = vmatpush1.msra.mxu0 %v213
    %1306 = vmatprep.subr.mxu0 %v212
    %1307 = vmatpush1.msra.mxu0 %v211
    %1308 = vmatprep.subr.mxu0 %v210
    %1309 = vmatpush1.msra.mxu0 %v209
    %1310 = vmatprep.subr.mxu0 %v208
    %1311 = vmatpush1.msra.mxu0 %v207
    %1312 = vmatprep.subr.mxu0 %v206
    %1313 = vmatpush1.msra.mxu0 %v205
    %1314 = vmatprep.subr.mxu0 %v204
    %1315 = vmatpush1.msra.mxu0 %v203
    %1316 = vmatprep.subr.mxu0 %v202
    %1317 = vmatpush1.msra.mxu0 %v201
    %1318 = vmatprep.subr.mxu0 %v200
    %1319 = vmatpush1.msra.mxu0 %v199
    %1320 = vmatprep.subr.mxu0 %v198
    %1321 = vmatpush1.msra.mxu0 %v197
    %1322 = vmatprep.subr.mxu0 %v196
    %1323 = vmatpush1.msra.mxu0 %v195
    %1324 = vmatprep.subr.mxu0 %v194
    %1325 = vmatpush1.msra.mxu0 %v193
    %1326 = vmatprep.subr.mxu0 0.0
    %1327 = vmatpush2.msra.mxu0 0.0
    %1328 = vmatprep.subr.mxu0 0.0
    %1329 = vmatpush2.msra.mxu0 0.0
    %1330 = vmatprep.subr.mxu0 0.0
    %1331 = vmatpush2.msra.mxu0 0.0
    %1332 = vmatprep.subr.mxu0 0.0
    %1333 = vmatpush2.msra.mxu0 0.0
    %1334 = vmatprep.subr.mxu0 0.0
    %1335 = vmatpush2.msra.mxu0 0.0
    %1336 = vmatprep.subr.mxu0 0.0
    %1337 = vmatpush2.msra.mxu0 0.0
    %1338 = vmatprep.subr.mxu0 0.0
    %1339 = vmatpush2.msra.mxu0 0.0
    %1340 = vmatprep.subr.mxu0 0.0
    %1341 = vmatpush2.msra.mxu0 0.0
    %1342 = vmatprep.subr.mxu0 0.0
    %1343 = vmatpush2.msra.mxu0 0.0
    %1344 = vmatprep.subr.mxu0 0.0
    %1345 = vmatpush2.msra.mxu0 0.0
    %1346 = vmatprep.subr.mxu0 0.0
    %1347 = vmatpush2.msra.mxu0 0.0
    %1348 = vmatprep.subr.mxu0 0.0
    %1349 = vmatpush2.msra.mxu0 0.0
    %1350 = vmatprep.subr.mxu0 0.0
    %1351 = vmatpush2.msra.mxu0 0.0
    %1352 = vmatprep.subr.mxu0 0.0
    %1353 = vmatpush2.msra.mxu0 0.0
    %1354 = vmatprep.subr.mxu0 0.0
    %1355 = vmatpush2.msra.mxu0 0.0
    %1356 = vmatprep.subr.mxu0 0.0
    %1357 = vmatpush2.msra.mxu0 0.0
    %1358 = vmatprep.mubr.f32.mxu0 0.0
    %1359 = vmatmul.mubr.f32.gmra.mxu0 %v1293
    %v1360 = vpop.f32.mrf.mxu0
    %v1361 = vadd.f32 0.0, %v1360
    %v1362 = vpop.f32.mrf.mxu0
    %v1363 = vadd.f32 0.0, %v1362
    %1364 = vdwg.mxu0
    %v1366 = vrot.slane %v1361, 1
    %v1368 = vadd.f32 %v190, %v1366
    %v1369 = vmax.f32 %v1368, 0.0
    %v1371 = vrot.slane %v1369, 7
    %1373 = vmatprep.subr.mxu0 0.0
    %1374 = vmatpush1.msra.mxu0 %v240
    %1375 = vmatprep.subr.mxu0 0.0
    %1376 = vmatpush1.msra.mxu0 %v239
    %1377 = vmatprep.subr.mxu0 0.0
    %1378 = vmatpush1.msra.mxu0 %v238
    %1379 = vmatprep.subr.mxu0 0.0
    %1380 = vmatpush1.msra.mxu0 %v237
    %1381 = vmatprep.subr.mxu0 0.0
    %1382 = vmatpush1.msra.mxu0 %v236
    %1383 = vmatprep.subr.mxu0 0.0
    %1384 = vmatpush1.msra.mxu0 %v235
    %1385 = vmatprep.subr.mxu0 0.0
    %1386 = vmatpush1.msra.mxu0 %v234
    %1387 = vmatprep.subr.mxu0 0.0
    %1388 = vmatpush1.msra.mxu0 %v233
    %1389 = vmatprep.subr.mxu0 0.0
    %1390 = vmatpush1.msra.mxu0 %v232
    %1391 = vmatprep.subr.mxu0 0.0
    %1392 = vmatpush1.msra.mxu0 %v231
    %1393 = vmatprep.subr.mxu0 0.0
    %1394 = vmatpush1.msra.mxu0 %v230
    %1395 = vmatprep.subr.mxu0 0.0
    %1396 = vmatpush1.msra.mxu0 %v229
    %1397 = vmatprep.subr.mxu0 0.0
    %1398 = vmatpush1.msra.mxu0 %v228
    %1399 = vmatprep.subr.mxu0 0.0
    %1400 = vmatpush1.msra.mxu0 %v227
    %1401 = vmatprep.subr.mxu0 0.0
    %1402 = vmatpush1.msra.mxu0 %v226
    %1403 = vmatprep.subr.mxu0 0.0
    %1404 = vmatpush1.msra.mxu0 %v225
    %1405 = vmatprep.subr.mxu0 0.0
    %1406 = vmatpush2.msra.mxu0 0.0
    %1407 = vmatprep.subr.mxu0 0.0
    %1408 = vmatpush2.msra.mxu0 0.0
    %1409 = vmatprep.subr.mxu0 0.0
    %1410 = vmatpush2.msra.mxu0 0.0
    %1411 = vmatprep.subr.mxu0 0.0
    %1412 = vmatpush2.msra.mxu0 0.0
    %1413 = vmatprep.subr.mxu0 0.0
    %1414 = vmatpush2.msra.mxu0 0.0
    %1415 = vmatprep.subr.mxu0 0.0
    %1416 = vmatpush2.msra.mxu0 0.0
    %1417 = vmatprep.subr.mxu0 0.0
    %1418 = vmatpush2.msra.mxu0 0.0
    %1419 = vmatprep.subr.mxu0 0.0
    %1420 = vmatpush2.msra.mxu0 0.0
    %1421 = vmatprep.subr.mxu0 0.0
    %1422 = vmatpush2.msra.mxu0 0.0
    %1423 = vmatprep.subr.mxu0 0.0
    %1424 = vmatpush2.msra.mxu0 0.0
    %1425 = vmatprep.subr.mxu0 0.0
    %1426 = vmatpush2.msra.mxu0 0.0
    %1427 = vmatprep.subr.mxu0 0.0
    %1428 = vmatpush2.msra.mxu0 0.0
    %1429 = vmatprep.subr.mxu0 0.0
    %1430 = vmatpush2.msra.mxu0 0.0
    %1431 = vmatprep.subr.mxu0 0.0
    %1432 = vmatpush2.msra.mxu0 0.0
    %1433 = vmatprep.subr.mxu0 0.0
    %1434 = vmatpush2.msra.mxu0 0.0
    %1435 = vmatprep.subr.mxu0 0.0
    %1436 = vmatpush2.msra.mxu0 0.0
    %1437 = vmatprep.mubr.f32.mxu0 0.0
    %1438 = vmatmul.mubr.f32.gmra.mxu0 %v1371
    %v1439 = vpop.f32.mrf.mxu0
    %v1440 = vadd.f32 %v1363, %v1439
    %v1441 = vpop.f32.mrf.mxu0
    %1442 = vdwg.mxu0
    %v1443 = vadd.f32 %v1440, %v241
    %v1444 = vmax.f32 %v1443, 0.0
    %v1445 = vld [vmem:[#allocation10] sm:$0xff]
    %v1446 = vld [vmem:[#allocation10 + $0x8] sm:$0xff]
    %v1447 = vld [vmem:[#allocation10 + $0x10] sm:$0xff]
    %v1448 = vld [vmem:[#allocation10 + $0x18] sm:$0xff]
    %v1449 = vld [vmem:[#allocation10 + $0x20] sm:$0xff]
    %v1450 = vld [vmem:[#allocation10 + $0x28] sm:$0xff]
    %v1451 = vld [vmem:[#allocation10 + $0x30] sm:$0xff]
    %v1452 = vld [vmem:[#allocation10 + $0x38] sm:$0xff]
    %v1453 = vld [vmem:[#allocation10 + $0x40] sm:$0xff]
    %v1454 = vld [vmem:[#allocation10 + $0x48] sm:$0xff]
    %v1455 = vld [vmem:[#allocation10 + $0x50] sm:$0xff]
    %v1456 = vld [vmem:[#allocation10 + $0x58] sm:$0xff]
    %v1457 = vld [vmem:[#allocation10 + $0x60] sm:$0xff]
    %v1458 = vld [vmem:[#allocation10 + $0x68] sm:$0xff]
    %v1459 = vld [vmem:[#allocation10 + $0x70] sm:$0xff]
    %v1460 = vld [vmem:[#allocation10 + $0x78] sm:$0xff]
    %v1461 = vld [vmem:[%s8] sm:$0x1]
    %1462 = vmatprep.subr.mxu0 0.0
    %1463 = vmatpush1.msra.mxu0 %v1460
    %1464 = vmatprep.subr.mxu0 0.0
    %1465 = vmatpush1.msra.mxu0 %v1459
    %1466 = vmatprep.subr.mxu0 0.0
    %1467 = vmatpush1.msra.mxu0 %v1458
    %1468 = vmatprep.subr.mxu0 0.0
    %1469 = vmatpush1.msra.mxu0 %v1457
    %1470 = vmatprep.subr.mxu0 0.0
    %1471 = vmatpush1.msra.mxu0 %v1456
    %1472 = vmatprep.subr.mxu0 0.0
    %1473 = vmatpush1.msra.mxu0 %v1455
    %1474 = vmatprep.subr.mxu0 0.0
    %1475 = vmatpush1.msra.mxu0 %v1454
    %1476 = vmatprep.subr.mxu0 0.0
    %1477 = vmatpush1.msra.mxu0 %v1453
    %1478 = vmatprep.subr.mxu0 0.0
    %1479 = vmatpush1.msra.mxu0 %v1452
    %1480 = vmatprep.subr.mxu0 0.0
    %1481 = vmatpush1.msra.mxu0 %v1451
    %1482 = vmatprep.subr.mxu0 0.0
    %1483 = vmatpush1.msra.mxu0 %v1450
    %1484 = vmatprep.subr.mxu0 0.0
    %1485 = vmatpush1.msra.mxu0 %v1449
    %1486 = vmatprep.subr.mxu0 0.0
    %1487 = vmatpush1.msra.mxu0 %v1448
    %1488 = vmatprep.subr.mxu0 0.0
    %1489 = vmatpush1.msra.mxu0 %v1447
    %1490 = vmatprep.subr.mxu0 0.0
    %1491 = vmatpush1.msra.mxu0 %v1446
    %1492 = vmatprep.subr.mxu0 0.0
    %1493 = vmatpush1.msra.mxu0 %v1445
    %1494 = vmatprep.subr.mxu0 0.0
    %1495 = vmatpush2.msra.mxu0 0.0
    %1496 = vmatprep.subr.mxu0 0.0
    %1497 = vmatpush2.msra.mxu0 0.0
    %1498 = vmatprep.subr.mxu0 0.0
    %1499 = vmatpush2.msra.mxu0 0.0
    %1500 = vmatprep.subr.mxu0 0.0
    %1501 = vmatpush2.msra.mxu0 0.0
    %1502 = vmatprep.subr.mxu0 0.0
    %1503 = vmatpush2.msra.mxu0 0.0
    %1504 = vmatprep.subr.mxu0 0.0
    %1505 = vmatpush2.msra.mxu0 0.0
    %1506 = vmatprep.subr.mxu0 0.0
    %1507 = vmatpush2.msra.mxu0 0.0
    %1508 = vmatprep.subr.mxu0 0.0
    %1509 = vmatpush2.msra.mxu0 0.0
    %1510 = vmatprep.subr.mxu0 0.0
    %1511 = vmatpush2.msra.mxu0 0.0
    %1512 = vmatprep.subr.mxu0 0.0
    %1513 = vmatpush2.msra.mxu0 0.0
    %1514 = vmatprep.subr.mxu0 0.0
    %1515 = vmatpush2.msra.mxu0 0.0
    %1516 = vmatprep.subr.mxu0 0.0
    %1517 = vmatpush2.msra.mxu0 0.0
    %1518 = vmatprep.subr.mxu0 0.0
    %1519 = vmatpush2.msra.mxu0 0.0
    %1520 = vmatprep.subr.mxu0 0.0
    %1521 = vmatpush2.msra.mxu0 0.0
    %1522 = vmatprep.subr.mxu0 0.0
    %1523 = vmatpush2.msra.mxu0 0.0
    %1524 = vmatprep.subr.mxu0 0.0
    %1525 = vmatpush2.msra.mxu0 0.0
    %1526 = vmatprep.mubr.f32.mxu0 0.0
    %1527 = vmatmul.mubr.f32.gmra.mxu0 %v1444
    %v1528 = vpop.f32.mrf.mxu0
    %v1529 = vadd.f32 %v1461, %v1528
    %v1530 = vpop.f32.mrf.mxu0
    %1531 = vdwg.mxu0
    %1532 = vst [vmem:[#allocation11] sm:$0x1] %v1529
    // Predicated region
    $region58: #{tpu_custom_call.1} parent=1 // pred_check
      _
    $region59: #{tpu_custom_call.1} parent=1 // pred_check_branch
      %1534 = sbr.rel (0) target = $region61
    $region60: #{tpu_custom_call.1} parent=1 // pred_region
      %s1536 = ssub.s32 16, 16
      %1537 = vsyncadd [#allocation4], %s1536
      %s1539 = sshll.u32 [#allocation11], 4
      %s1540 = int_to_ptr.vmem [resolvable:$true] %s1539
      %1542 = dma.vmem_to_hbm [thread:$0]  %s1540, 16, %s9, [#allocation4]
    $region61: #{tpu_custom_call.1} parent=1 // pred_fallthru
      _
    // Predicated region
    $region62: #{tpu_custom_call.1} parent=1 // pred_check
      _
    $region63: #{tpu_custom_call.1} parent=1 // pred_check_branch
      %1544 = sbr.rel (0) target = $region65
    $region64: #{tpu_custom_call.1} parent=1 // pred_region
      %1545 = dma.done [#allocation4], 16
    $region65: #{tpu_custom_call.1} parent=1 // pred_fallthru
      _
    %1546 = vsyncpa [#allocation3], 1
    %1547 = vsyncpa [#allocation6], 1
    %1548 = vsyncpa [#allocation9], 1
    %1549 = vsyncpa [#allocation4], 1

</llo_original>
